<compile_context>
chip_gen: v6e
topology: v6e:2x2x1
jax: 0.10.0
libtpu: 0.0.40
codegen_flags: <defaults>
</compile_context>

<pallas_src>
import numpy as np
import jax
import jax.numpy as jnp
from jax.experimental import pallas as pl
from jax.experimental.pallas import tpu as pltpu

# ---- static model constants (implied by the PyTorch module) -----------------
N_BATCH = 2
C_IN = 2
H_IN, W_IN = 4, 40          # chosen so the flattened feature size is 176
PAD = 2                     # conv1 padding
C1, C2 = 8, 8
FC1_OUT, FC2_OUT, FC3_OUT = 64, 16, 4
OUT_LANES = 128             # lane-dense output slab; logits live in [:, :4]
FLAT = C2 * ((H_IN + 2 * PAD) // 4) * ((W_IN + 2 * PAD) // 4)   # 176


# ---- the kernel --------------------------------------------------------------
def cnn1k_kernel(x_ref, m1_ref, b1s_ref, m2_ref, b2s_ref, c2_ref, g_ref,
                 bf1_ref, w2_ref, bf2_ref, w3_ref, bf3_ref, out_ref):
    def mm(a, b):
        return jnp.dot(a, b, preferred_element_type=jnp.float32)

    m1a, m1b = m1_ref[0], m1_ref[1]          # conv1 folded with width pool
    m2a, m2b = m2_ref[0], m2_ref[1]          # conv2 folded with width pool
    b1s = b1s_ref[...]
    b2s = b2s_ref[...]
    c2row = c2_ref[...]                      # pooled-padding-row constant

    def stage12(h_pair):
        # conv1(1x1, pad folded) + relu + pool1 for the interior row pair
        # (input rows h = 2*h_pair, 2*h_pair+1 of every sample).
        xa = x_ref[2 * h_pair]               # [N, Cin*W]   (80 lanes)
        xb = x_ref[2 * h_pair + 1]           # [N, Cin*W]
        z = jnp.maximum(jnp.maximum(mm(xa, m1a), mm(xa, m1b)),
                        jnp.maximum(mm(xb, m1a), mm(xb, m1b)))
        u = jnp.maximum(z + b1s, 0.0)        # [N, C1*Wq] = [N, 176]
        # conv2(1x1) + relu + pool2; the all-padding pooled rows of stage 1
        # contribute the precomputed constant c2row.
        v = jnp.maximum(jnp.maximum(mm(u, m2a), mm(u, m2b)) + b2s, 0.0)
        return jnp.maximum(v, c2row)         # [N, C2*Wr] = [N, 88]

    p0 = stage12(0)                          # final pooled row h=0, all samples
    p1 = stage12(1)                          # final pooled row h=1

    # flatten (torch c,h,w order folded into g) + fc1 + relu
    y = jnp.maximum(bf1_ref[...] + mm(p0, g_ref[0]) + mm(p1, g_ref[1]), 0.0)
    # fc2 + relu, fc3 (zero-padded to 128 lanes -> unmasked lane-dense store)
    y = jnp.maximum(mm(y, w2_ref[...]) + bf2_ref[...], 0.0)
    out_ref[...] = mm(y, w3_ref[...]) + bf3_ref[...]


# ---- constant construction (runs ONCE, in numpy) ------------------------------
def _build_constants(params):
    (w1, b1, w2, b2, fw1, fb1, fw2, fb2, fw3, fb3) = [
        np.asarray(p, np.float32) for p in params]
    c1, cin = w1.shape[0], w1.shape[1]
    c2 = w2.shape[0]
    w = W_IN
    wp = w + 2 * PAD
    wq, wr = wp // 2, wp // 4
    hr = (H_IN + 2 * PAD) // 4
    fc1_out, flat = fw1.shape
    fc2_out, fc3_out = fw2.shape[0], fw3.shape[0]
    assert flat == c2 * hr * wr and hr == 2   # layout math assumes this model

    w1m = w1.reshape(c1, cin)                 # 1x1 conv kernels
    w2m = w2.reshape(c2, c1)

    # conv1 folded with the width max-pool selectors:
    #   M1[j][(ci, w_in), (co, wq)] = W1[co, ci]  iff  2*wq + j == w_in + PAD
    # (padded columns have no source row -> all-zero column -> relu(b1) there).
    m1 = np.zeros((2, cin * w, c1 * wq), np.float32)
    for j in range(2):
        for q in range(wq):
            src = 2 * q + j - PAD
            if 0 <= src < w:
                for co in range(c1):
                    for ci in range(cin):
                        m1[j, ci * w + src, co * wq + q] = w1m[co, ci]

    # conv2 folded with its width pool: M2[j][(ci, wq), (co, wr)] = W2[co, ci]
    m2 = np.zeros((2, c1 * wq, c2 * wr), np.float32)
    for j in range(2):
        for r in range(wr):
            src = 2 * r + j
            for co in range(c2):
                for ci in range(c1):
                    m2[j, ci * wq + src, co * wr + r] = w2m[co, ci]

    b1s = np.repeat(b1, wq)[None, :]                          # [1, C1*Wq]
    b2s = np.repeat(b2, wr)[None, :]                          # [1, C2*Wr]
    # conv1's all-padding pooled rows after conv2 + relu + pool2 -> constant.
    c2vec = np.maximum(w2m @ np.maximum(b1, 0.0) + b2, 0.0)
    c2row = np.repeat(c2vec, wr)[None, :]                     # [1, C2*Wr]

    # fc1 with the torch (c, h, w) flatten order folded in, split per pooled h.
    g = fw1.reshape(fc1_out, c2, hr, wr).transpose(2, 1, 3, 0)
    g = np.ascontiguousarray(g).reshape(hr, c2 * wr, fc1_out) # [2, 88, 64]
    bf1 = fb1.reshape(1, fc1_out)
    w2t = np.ascontiguousarray(fw2.T)                         # [64, 16]
    bf2 = fb2.reshape(1, fc2_out)
    # fc3 padded to a 128-lane slab so the writeback is lane-dense.
    w3p = np.zeros((fc2_out, OUT_LANES), np.float32)
    w3p[:, :fc3_out] = fw3.T
    bf3p = np.zeros((1, OUT_LANES), np.float32)
    bf3p[0, :fc3_out] = fb3

    consts = (m1, b1s, m2, b2s, c2row, g, bf1, w2t, bf2, w3p, bf3p)
    return tuple(jnp.asarray(c) for c in consts), fc3_out


# ---- factory: builds constants once, returns a jitted forward -----------------
def make_cnn1k_forward(params):
    consts, fc3_out = _build_constants(params)

    def full_spec(arr):
        nd = arr.ndim
        return pl.BlockSpec(arr.shape, lambda i, _nd=nd: (0,) * _nd)

    @jax.jit
    def forward(x):
        n, cin, h, w = x.shape
        assert (cin, h, w) == (C_IN, H_IN, W_IN)
        # Layout: leading axis = input row h, then (sample, channel*width) —
        # gives the kernel the even/odd row pairs with zero-cost indexing.
        x3d = jnp.transpose(x.astype(jnp.float32), (2, 0, 1, 3)
                            ).reshape(h, n, cin * w)          # [4, N, 80]
        operands = (x3d,) + consts
        out = pl.pallas_call(
            cnn1k_kernel,
            out_shape=jax.ShapeDtypeStruct((n, OUT_LANES), jnp.float32),
            grid=(1,),                        # whole batch in one step (N=2)
            in_specs=[full_spec(a) for a in operands],
            out_specs=pl.BlockSpec((n, OUT_LANES), lambda i: (0, 0)),
            compiler_params=pltpu.CompilerParams(
                dimension_semantics=("arbitrary",)),
        )(*operands)
        # TODO(synk): for large batches, tile n over a leading "parallel" grid
        # axis (v7x megacore) with blocks budgeted for 64 MiB VMEM.
        return out[:, :fc3_out]

    return forward


# ---- pure-JAX reference (correctness check only) ------------------------------
def reference_forward(x, params):
    (w1, b1, w2, b2, fw1, fb1, fw2, fb2, fw3, fb3) = params
    dn = ('NCHW', 'OIHW', 'NCHW')
    hp = jax.lax.Precision.HIGHEST

    def max_pool(y):
        return jax.lax.reduce_window(y, -jnp.inf, jax.lax.max,
                                     (1, 1, 2, 2), (1, 1, 2, 2), 'VALID')

    y = jax.lax.conv_general_dilated(x, w1, (1, 1), ((PAD, PAD), (PAD, PAD)),
                                     dimension_numbers=dn, precision=hp)
    y = jax.nn.relu(y + b1.reshape(1, -1, 1, 1))
    y = max_pool(y)
    y = jax.lax.conv_general_dilated(y, w2, (1, 1), 'VALID',
                                     dimension_numbers=dn, precision=hp)
    y = jax.nn.relu(y + b2.reshape(1, -1, 1, 1))
    y = max_pool(y)
    y = y.reshape(y.shape[0], -1)
    y = jax.nn.relu(jnp.matmul(y, fw1.T, precision=hp) + fb1)
    y = jax.nn.relu(jnp.matmul(y, fw2.T, precision=hp) + fb2)
    return jnp.matmul(y, fw3.T, precision=hp) + fb3


if __name__ == "__main__":
    key = jax.random.PRNGKey(0)
    ks = jax.random.split(key, 11)
    s = 0.3  # deterministic synthetic init (not a checkpoint load)
    params = (
        s * jax.random.normal(ks[0], (C1, C_IN, 1, 1), jnp.float32),
        s * jax.random.normal(ks[1], (C1,), jnp.float32),
        s * jax.random.normal(ks[2], (C2, C1, 1, 1), jnp.float32),
        s * jax.random.normal(ks[3], (C2,), jnp.float32),
        s * jax.random.normal(ks[4], (FC1_OUT, FLAT), jnp.float32),
        s * jax.random.normal(ks[5], (FC1_OUT,), jnp.float32),
        s * jax.random.normal(ks[6], (FC2_OUT, FC1_OUT), jnp.float32),
        s * jax.random.normal(ks[7], (FC2_OUT,), jnp.float32),
        s * jax.random.normal(ks[8], (FC3_OUT, FC2_OUT), jnp.float32),
        s * jax.random.normal(ks[9], (FC3_OUT,), jnp.float32),
    )
    x = jax.random.normal(ks[10], (N_BATCH, C_IN, H_IN, W_IN), jnp.float32)

    forward = make_cnn1k_forward(params)     # constants built once, here
    out = jax.block_until_ready(forward(x))
    assert out.shape == (N_BATCH, FC3_OUT)

    ref = reference_forward(x, params)
    np.testing.assert_allclose(np.asarray(out), np.asarray(ref),
                               rtol=1e-5, atol=1e-4)
    print("KERNEL_OK")
</pallas_src>

<mosaic_0001>
module attributes {stable_mosaic.version = 11 : i64} {
  func.func @cnn1k_kernel(%arg0: i32, %arg1: memref<4x2x80xf32, #tpu.memory_space<vmem>>, %arg2: memref<2x80x176xf32, #tpu.memory_space<vmem>>, %arg3: memref<1x176xf32, #tpu.memory_space<vmem>>, %arg4: memref<2x176x88xf32, #tpu.memory_space<vmem>>, %arg5: memref<1x88xf32, #tpu.memory_space<vmem>>, %arg6: memref<1x88xf32, #tpu.memory_space<vmem>>, %arg7: memref<2x88x64xf32, #tpu.memory_space<vmem>>, %arg8: memref<1x64xf32, #tpu.memory_space<vmem>>, %arg9: memref<64x16xf32, #tpu.memory_space<vmem>>, %arg10: memref<1x16xf32, #tpu.memory_space<vmem>>, %arg11: memref<16x128xf32, #tpu.memory_space<vmem>>, %arg12: memref<1x128xf32, #tpu.memory_space<vmem>>, %arg13: memref<2x128xf32, #tpu.memory_space<vmem>>) attributes {dimension_semantics = [#tpu.dimension_semantics<arbitrary>], iteration_bounds = array<i64: 1>, scalar_prefetch = 0 : i64, scratch_operands = 0 : i64, tpu.core_type = #tpu.core_type<tc>, window_params = [{pipeline_mode = #tpu.pipeline_mode<synchronous>, transform_indices = @transform_0, window_bounds = array<i64: 4, 2, 80>}, {pipeline_mode = #tpu.pipeline_mode<synchronous>, transform_indices = @transform_1, window_bounds = array<i64: 2, 80, 176>}, {pipeline_mode = #tpu.pipeline_mode<synchronous>, transform_indices = @transform_2, window_bounds = array<i64: 1, 176>}, {pipeline_mode = #tpu.pipeline_mode<synchronous>, transform_indices = @transform_3, window_bounds = array<i64: 2, 176, 88>}, {pipeline_mode = #tpu.pipeline_mode<synchronous>, transform_indices = @transform_4, window_bounds = array<i64: 1, 88>}, {pipeline_mode = #tpu.pipeline_mode<synchronous>, transform_indices = @transform_5, window_bounds = array<i64: 1, 88>}, {pipeline_mode = #tpu.pipeline_mode<synchronous>, transform_indices = @transform_6, window_bounds = array<i64: 2, 88, 64>}, {pipeline_mode = #tpu.pipeline_mode<synchronous>, transform_indices = @transform_7, window_bounds = array<i64: 1, 64>}, {pipeline_mode = #tpu.pipeline_mode<synchronous>, transform_indices = @transform_8, window_bounds = array<i64: 64, 16>}, {pipeline_mode = #tpu.pipeline_mode<synchronous>, transform_indices = @transform_9, window_bounds = array<i64: 1, 16>}, {pipeline_mode = #tpu.pipeline_mode<synchronous>, transform_indices = @transform_10, window_bounds = array<i64: 16, 128>}, {pipeline_mode = #tpu.pipeline_mode<synchronous>, transform_indices = @transform_11, window_bounds = array<i64: 1, 128>}, {pipeline_mode = #tpu.pipeline_mode<synchronous>, transform_indices = @transform_12, window_bounds = array<i64: 2, 128>}]} {
    %c0 = arith.constant 0 : index
    %c0_0 = arith.constant 0 : index
    %c0_1 = arith.constant 0 : index
    %0 = vector.load %arg2[%c0, %c0_0, %c0_1] : memref<2x80x176xf32, #tpu.memory_space<vmem>>, vector<1x80x176xf32>
    %1 = vector.shape_cast %0 : vector<1x80x176xf32> to vector<80x176xf32>
    %c1 = arith.constant 1 : index
    %c0_2 = arith.constant 0 : index
    %c0_3 = arith.constant 0 : index
    %2 = vector.load %arg2[%c1, %c0_2, %c0_3] : memref<2x80x176xf32, #tpu.memory_space<vmem>>, vector<1x80x176xf32>
    %3 = vector.shape_cast %2 : vector<1x80x176xf32> to vector<80x176xf32>
    %c0_4 = arith.constant 0 : index
    %c0_5 = arith.constant 0 : index
    %c0_6 = arith.constant 0 : index
    %4 = vector.load %arg4[%c0_4, %c0_5, %c0_6] : memref<2x176x88xf32, #tpu.memory_space<vmem>>, vector<1x176x88xf32>
    %5 = vector.shape_cast %4 : vector<1x176x88xf32> to vector<176x88xf32>
    %c1_7 = arith.constant 1 : index
    %c0_8 = arith.constant 0 : index
    %c0_9 = arith.constant 0 : index
    %6 = vector.load %arg4[%c1_7, %c0_8, %c0_9] : memref<2x176x88xf32, #tpu.memory_space<vmem>>, vector<1x176x88xf32>
    %7 = vector.shape_cast %6 : vector<1x176x88xf32> to vector<176x88xf32>
    %c0_10 = arith.constant 0 : index
    %c0_11 = arith.constant 0 : index
    %8 = vector.load %arg3[%c0_10, %c0_11] : memref<1x176xf32, #tpu.memory_space<vmem>>, vector<1x176xf32>
    %c0_12 = arith.constant 0 : index
    %c0_13 = arith.constant 0 : index
    %9 = vector.load %arg5[%c0_12, %c0_13] : memref<1x88xf32, #tpu.memory_space<vmem>>, vector<1x88xf32>
    %c0_14 = arith.constant 0 : index
    %c0_15 = arith.constant 0 : index
    %10 = vector.load %arg6[%c0_14, %c0_15] : memref<1x88xf32, #tpu.memory_space<vmem>>, vector<1x88xf32>
    %c0_16 = arith.constant 0 : index
    %c0_17 = arith.constant 0 : index
    %c0_18 = arith.constant 0 : index
    %11 = vector.load %arg1[%c0_16, %c0_17, %c0_18] : memref<4x2x80xf32, #tpu.memory_space<vmem>>, vector<1x2x80xf32>
    %12 = vector.shape_cast %11 : vector<1x2x80xf32> to vector<2x80xf32>
    %c1_19 = arith.constant 1 : index
    %c0_20 = arith.constant 0 : index
    %c0_21 = arith.constant 0 : index
    %13 = vector.load %arg1[%c1_19, %c0_20, %c0_21] : memref<4x2x80xf32, #tpu.memory_space<vmem>>, vector<1x2x80xf32>
    %14 = vector.shape_cast %13 : vector<1x2x80xf32> to vector<2x80xf32>
    %cst = arith.constant dense<0.000000e+00> : vector<2x176xf32>
    %15 = tpu.matmul %12, %1, %cst {dimension_numbers = #tpu.dot_dimension_numbers<[1], [0], [0], [1], [0, 0, 1, 1], [], []>} : vector<2x80xf32>, vector<80x176xf32>, vector<2x176xf32> -> vector<2x176xf32>
    %cst_22 = arith.constant dense<0.000000e+00> : vector<2x176xf32>
    %16 = tpu.matmul %12, %3, %cst_22 {dimension_numbers = #tpu.dot_dimension_numbers<[1], [0], [0], [1], [0, 0, 1, 1], [], []>} : vector<2x80xf32>, vector<80x176xf32>, vector<2x176xf32> -> vector<2x176xf32>
    %17 = arith.maximumf %15, %16 : vector<2x176xf32>
    %cst_23 = arith.constant dense<0.000000e+00> : vector<2x176xf32>
    %18 = tpu.matmul %14, %1, %cst_23 {dimension_numbers = #tpu.dot_dimension_numbers<[1], [0], [0], [1], [0, 0, 1, 1], [], []>} : vector<2x80xf32>, vector<80x176xf32>, vector<2x176xf32> -> vector<2x176xf32>
    %cst_24 = arith.constant dense<0.000000e+00> : vector<2x176xf32>
    %19 = tpu.matmul %14, %3, %cst_24 {dimension_numbers = #tpu.dot_dimension_numbers<[1], [0], [0], [1], [0, 0, 1, 1], [], []>} : vector<2x80xf32>, vector<80x176xf32>, vector<2x176xf32> -> vector<2x176xf32>
    %20 = arith.maximumf %18, %19 : vector<2x176xf32>
    %21 = arith.maximumf %17, %20 : vector<2x176xf32>
    %22 = vector.broadcast %8 : vector<1x176xf32> to vector<2x176xf32>
    %23 = arith.addf %21, %22 : vector<2x176xf32>
    %cst_25 = arith.constant 0.000000e+00 : f32
    %24 = vector.broadcast %cst_25 : f32 to vector<2x176xf32>
    %25 = arith.maximumf %23, %24 : vector<2x176xf32>
    %cst_26 = arith.constant dense<0.000000e+00> : vector<2x88xf32>
    %26 = tpu.matmul %25, %5, %cst_26 {dimension_numbers = #tpu.dot_dimension_numbers<[1], [0], [0], [1], [0, 0, 1, 1], [], []>} : vector<2x176xf32>, vector<176x88xf32>, vector<2x88xf32> -> vector<2x88xf32>
    %cst_27 = arith.constant dense<0.000000e+00> : vector<2x88xf32>
    %27 = tpu.matmul %25, %7, %cst_27 {dimension_numbers = #tpu.dot_dimension_numbers<[1], [0], [0], [1], [0, 0, 1, 1], [], []>} : vector<2x176xf32>, vector<176x88xf32>, vector<2x88xf32> -> vector<2x88xf32>
    %28 = arith.maximumf %26, %27 : vector<2x88xf32>
    %29 = vector.broadcast %9 : vector<1x88xf32> to vector<2x88xf32>
    %30 = arith.addf %28, %29 : vector<2x88xf32>
    %cst_28 = arith.constant 0.000000e+00 : f32
    %31 = vector.broadcast %cst_28 : f32 to vector<2x88xf32>
    %32 = arith.maximumf %30, %31 : vector<2x88xf32>
    %33 = vector.broadcast %10 : vector<1x88xf32> to vector<2x88xf32>
    %34 = arith.maximumf %32, %33 : vector<2x88xf32>
    %c2 = arith.constant 2 : index
    %c0_29 = arith.constant 0 : index
    %c0_30 = arith.constant 0 : index
    %35 = vector.load %arg1[%c2, %c0_29, %c0_30] : memref<4x2x80xf32, #tpu.memory_space<vmem>>, vector<1x2x80xf32>
    %36 = vector.shape_cast %35 : vector<1x2x80xf32> to vector<2x80xf32>
    %c3 = arith.constant 3 : index
    %c0_31 = arith.constant 0 : index
    %c0_32 = arith.constant 0 : index
    %37 = vector.load %arg1[%c3, %c0_31, %c0_32] : memref<4x2x80xf32, #tpu.memory_space<vmem>>, vector<1x2x80xf32>
    %38 = vector.shape_cast %37 : vector<1x2x80xf32> to vector<2x80xf32>
    %cst_33 = arith.constant dense<0.000000e+00> : vector<2x176xf32>
    %39 = tpu.matmul %36, %1, %cst_33 {dimension_numbers = #tpu.dot_dimension_numbers<[1], [0], [0], [1], [0, 0, 1, 1], [], []>} : vector<2x80xf32>, vector<80x176xf32>, vector<2x176xf32> -> vector<2x176xf32>
    %cst_34 = arith.constant dense<0.000000e+00> : vector<2x176xf32>
    %40 = tpu.matmul %36, %3, %cst_34 {dimension_numbers = #tpu.dot_dimension_numbers<[1], [0], [0], [1], [0, 0, 1, 1], [], []>} : vector<2x80xf32>, vector<80x176xf32>, vector<2x176xf32> -> vector<2x176xf32>
    %41 = arith.maximumf %39, %40 : vector<2x176xf32>
    %cst_35 = arith.constant dense<0.000000e+00> : vector<2x176xf32>
    %42 = tpu.matmul %38, %1, %cst_35 {dimension_numbers = #tpu.dot_dimension_numbers<[1], [0], [0], [1], [0, 0, 1, 1], [], []>} : vector<2x80xf32>, vector<80x176xf32>, vector<2x176xf32> -> vector<2x176xf32>
    %cst_36 = arith.constant dense<0.000000e+00> : vector<2x176xf32>
    %43 = tpu.matmul %38, %3, %cst_36 {dimension_numbers = #tpu.dot_dimension_numbers<[1], [0], [0], [1], [0, 0, 1, 1], [], []>} : vector<2x80xf32>, vector<80x176xf32>, vector<2x176xf32> -> vector<2x176xf32>
    %44 = arith.maximumf %42, %43 : vector<2x176xf32>
    %45 = arith.maximumf %41, %44 : vector<2x176xf32>
    %46 = vector.broadcast %8 : vector<1x176xf32> to vector<2x176xf32>
    %47 = arith.addf %45, %46 : vector<2x176xf32>
    %cst_37 = arith.constant 0.000000e+00 : f32
    %48 = vector.broadcast %cst_37 : f32 to vector<2x176xf32>
    %49 = arith.maximumf %47, %48 : vector<2x176xf32>
    %cst_38 = arith.constant dense<0.000000e+00> : vector<2x88xf32>
    %50 = tpu.matmul %49, %5, %cst_38 {dimension_numbers = #tpu.dot_dimension_numbers<[1], [0], [0], [1], [0, 0, 1, 1], [], []>} : vector<2x176xf32>, vector<176x88xf32>, vector<2x88xf32> -> vector<2x88xf32>
    %cst_39 = arith.constant dense<0.000000e+00> : vector<2x88xf32>
    %51 = tpu.matmul %49, %7, %cst_39 {dimension_numbers = #tpu.dot_dimension_numbers<[1], [0], [0], [1], [0, 0, 1, 1], [], []>} : vector<2x176xf32>, vector<176x88xf32>, vector<2x88xf32> -> vector<2x88xf32>
    %52 = arith.maximumf %50, %51 : vector<2x88xf32>
    %53 = vector.broadcast %9 : vector<1x88xf32> to vector<2x88xf32>
    %54 = arith.addf %52, %53 : vector<2x88xf32>
    %cst_40 = arith.constant 0.000000e+00 : f32
    %55 = vector.broadcast %cst_40 : f32 to vector<2x88xf32>
    %56 = arith.maximumf %54, %55 : vector<2x88xf32>
    %57 = vector.broadcast %10 : vector<1x88xf32> to vector<2x88xf32>
    %58 = arith.maximumf %56, %57 : vector<2x88xf32>
    %c0_41 = arith.constant 0 : index
    %c0_42 = arith.constant 0 : index
    %59 = vector.load %arg8[%c0_41, %c0_42] : memref<1x64xf32, #tpu.memory_space<vmem>>, vector<1x64xf32>
    %c0_43 = arith.constant 0 : index
    %c0_44 = arith.constant 0 : index
    %c0_45 = arith.constant 0 : index
    %60 = vector.load %arg7[%c0_43, %c0_44, %c0_45] : memref<2x88x64xf32, #tpu.memory_space<vmem>>, vector<1x88x64xf32>
    %61 = vector.shape_cast %60 : vector<1x88x64xf32> to vector<88x64xf32>
    %cst_46 = arith.constant dense<0.000000e+00> : vector<2x64xf32>
    %62 = tpu.matmul %34, %61, %cst_46 {dimension_numbers = #tpu.dot_dimension_numbers<[1], [0], [0], [1], [0, 0, 1, 1], [], []>} : vector<2x88xf32>, vector<88x64xf32>, vector<2x64xf32> -> vector<2x64xf32>
    %63 = vector.broadcast %59 : vector<1x64xf32> to vector<2x64xf32>
    %64 = arith.addf %63, %62 : vector<2x64xf32>
    %c1_47 = arith.constant 1 : index
    %c0_48 = arith.constant 0 : index
    %c0_49 = arith.constant 0 : index
    %65 = vector.load %arg7[%c1_47, %c0_48, %c0_49] : memref<2x88x64xf32, #tpu.memory_space<vmem>>, vector<1x88x64xf32>
    %66 = vector.shape_cast %65 : vector<1x88x64xf32> to vector<88x64xf32>
    %cst_50 = arith.constant dense<0.000000e+00> : vector<2x64xf32>
    %67 = tpu.matmul %58, %66, %cst_50 {dimension_numbers = #tpu.dot_dimension_numbers<[1], [0], [0], [1], [0, 0, 1, 1], [], []>} : vector<2x88xf32>, vector<88x64xf32>, vector<2x64xf32> -> vector<2x64xf32>
    %68 = arith.addf %64, %67 : vector<2x64xf32>
    %cst_51 = arith.constant 0.000000e+00 : f32
    %69 = vector.broadcast %cst_51 : f32 to vector<2x64xf32>
    %70 = arith.maximumf %68, %69 : vector<2x64xf32>
    %c0_52 = arith.constant 0 : index
    %c0_53 = arith.constant 0 : index
    %71 = vector.load %arg9[%c0_52, %c0_53] : memref<64x16xf32, #tpu.memory_space<vmem>>, vector<64x16xf32>
    %cst_54 = arith.constant dense<0.000000e+00> : vector<2x16xf32>
    %72 = tpu.matmul %70, %71, %cst_54 {dimension_numbers = #tpu.dot_dimension_numbers<[1], [0], [0], [1], [0, 0, 1, 1], [], []>} : vector<2x64xf32>, vector<64x16xf32>, vector<2x16xf32> -> vector<2x16xf32>
    %c0_55 = arith.constant 0 : index
    %c0_56 = arith.constant 0 : index
    %73 = vector.load %arg10[%c0_55, %c0_56] : memref<1x16xf32, #tpu.memory_space<vmem>>, vector<1x16xf32>
    %74 = vector.broadcast %73 : vector<1x16xf32> to vector<2x16xf32>
    %75 = arith.addf %72, %74 : vector<2x16xf32>
    %cst_57 = arith.constant 0.000000e+00 : f32
    %76 = vector.broadcast %cst_57 : f32 to vector<2x16xf32>
    %77 = arith.maximumf %75, %76 : vector<2x16xf32>
    %c0_58 = arith.constant 0 : index
    %c0_59 = arith.constant 0 : index
    %78 = vector.load %arg11[%c0_58, %c0_59] : memref<16x128xf32, #tpu.memory_space<vmem>>, vector<16x128xf32>
    %cst_60 = arith.constant dense<0.000000e+00> : vector<2x128xf32>
    %79 = tpu.matmul %77, %78, %cst_60 {dimension_numbers = #tpu.dot_dimension_numbers<[1], [0], [0], [1], [0, 0, 1, 1], [], []>} : vector<2x16xf32>, vector<16x128xf32>, vector<2x128xf32> -> vector<2x128xf32>
    %c0_61 = arith.constant 0 : index
    %c0_62 = arith.constant 0 : index
    %80 = vector.load %arg12[%c0_61, %c0_62] : memref<1x128xf32, #tpu.memory_space<vmem>>, vector<1x128xf32>
    %81 = vector.broadcast %80 : vector<1x128xf32> to vector<2x128xf32>
    %82 = arith.addf %79, %81 : vector<2x128xf32>
    %c0_63 = arith.constant 0 : index
    %c0_64 = arith.constant 0 : index
    %83 = vector.load %arg13[%c0_63, %c0_64] : memref<2x128xf32, #tpu.memory_space<vmem>>, vector<2x128xf32>
    tpu.vector_store %arg13[%c0_63, %c0_64], %82 {strides = array<i32>} : memref<2x128xf32, #tpu.memory_space<vmem>>, vector<2x128xf32>,
    return
  }
  func.func @transform_0(%arg0: i32) -> (i32, i32, i32) {
    %c0_i32 = arith.constant 0 : i32
    %c0_i32_0 = arith.constant 0 : i32
    %c0_i32_1 = arith.constant 0 : i32
    %c0_i32_2 = arith.constant 0 : i32
    return %c0_i32, %c0_i32_0, %c0_i32_1 : i32, i32, i32
  }
  func.func @transform_1(%arg0: i32) -> (i32, i32, i32) {
    %c0_i32 = arith.constant 0 : i32
    %c0_i32_0 = arith.constant 0 : i32
    %c0_i32_1 = arith.constant 0 : i32
    %c0_i32_2 = arith.constant 0 : i32
    return %c0_i32, %c0_i32_0, %c0_i32_1 : i32, i32, i32
  }
  func.func @transform_2(%arg0: i32) -> (i32, i32) {
    %c0_i32 = arith.constant 0 : i32
    %c0_i32_0 = arith.constant 0 : i32
    %c0_i32_1 = arith.constant 0 : i32
    return %c0_i32, %c0_i32_0 : i32, i32
  }
  func.func @transform_3(%arg0: i32) -> (i32, i32, i32) {
    %c0_i32 = arith.constant 0 : i32
    %c0_i32_0 = arith.constant 0 : i32
    %c0_i32_1 = arith.constant 0 : i32
    %c0_i32_2 = arith.constant 0 : i32
    return %c0_i32, %c0_i32_0, %c0_i32_1 : i32, i32, i32
  }
  func.func @transform_4(%arg0: i32) -> (i32, i32) {
    %c0_i32 = arith.constant 0 : i32
    %c0_i32_0 = arith.constant 0 : i32
    %c0_i32_1 = arith.constant 0 : i32
    return %c0_i32, %c0_i32_0 : i32, i32
  }
  func.func @transform_5(%arg0: i32) -> (i32, i32) {
    %c0_i32 = arith.constant 0 : i32
    %c0_i32_0 = arith.constant 0 : i32
    %c0_i32_1 = arith.constant 0 : i32
    return %c0_i32, %c0_i32_0 : i32, i32
  }
  func.func @transform_6(%arg0: i32) -> (i32, i32, i32) {
    %c0_i32 = arith.constant 0 : i32
    %c0_i32_0 = arith.constant 0 : i32
    %c0_i32_1 = arith.constant 0 : i32
    %c0_i32_2 = arith.constant 0 : i32
    return %c0_i32, %c0_i32_0, %c0_i32_1 : i32, i32, i32
  }
  func.func @transform_7(%arg0: i32) -> (i32, i32) {
    %c0_i32 = arith.constant 0 : i32
    %c0_i32_0 = arith.constant 0 : i32
    %c0_i32_1 = arith.constant 0 : i32
    return %c0_i32, %c0_i32_0 : i32, i32
  }
  func.func @transform_8(%arg0: i32) -> (i32, i32) {
    %c0_i32 = arith.constant 0 : i32
    %c0_i32_0 = arith.constant 0 : i32
    %c0_i32_1 = arith.constant 0 : i32
    return %c0_i32, %c0_i32_0 : i32, i32
  }
  func.func @transform_9(%arg0: i32) -> (i32, i32) {
    %c0_i32 = arith.constant 0 : i32
    %c0_i32_0 = arith.constant 0 : i32
    %c0_i32_1 = arith.constant 0 : i32
    return %c0_i32, %c0_i32_0 : i32, i32
  }
  func.func @transform_10(%arg0: i32) -> (i32, i32) {
    %c0_i32 = arith.constant 0 : i32
    %c0_i32_0 = arith.constant 0 : i32
    %c0_i32_1 = arith.constant 0 : i32
    return %c0_i32, %c0_i32_0 : i32, i32
  }
  func.func @transform_11(%arg0: i32) -> (i32, i32) {
    %c0_i32 = arith.constant 0 : i32
    %c0_i32_0 = arith.constant 0 : i32
    %c0_i32_1 = arith.constant 0 : i32
    return %c0_i32, %c0_i32_0 : i32, i32
  }
  func.func @transform_12(%arg0: i32) -> (i32, i32) {
    %c0_i32 = arith.constant 0 : i32
    %c0_i32_0 = arith.constant 0 : i32
    %c0_i32_1 = arith.constant 0 : i32
    return %c0_i32, %c0_i32_0 : i32, i32
  }
}

</mosaic_0001>

<llo_original>
// kernel: forward.1
$region0: #{forward.1}
  #allocation0 [shape = 'u32[]', space=smem, size = 0x4, offset = 0x4, fixed_abs, tag = 'smem constant byte address 0x4 - core index']
  #allocation1 [shape = 'u32[144,128]{1,0:T(1,128)}', space=vmem, size = 0x12000, scoped, tag = 'internal scratch']
  %s0 = inlined_call_operand.vmem [shape: f32[4,2,80], index: 0, kind: input, shape index: {}]
  %s1 = inlined_call_operand.hbm [shape: f32[2,80,176], index: 1, kind: input, shape index: {}]
  %s2 = inlined_call_operand.vmem [shape: f32[1,176], index: 2, kind: input, shape index: {}]
  %s3 = inlined_call_operand.hbm [shape: f32[2,176,88], index: 3, kind: input, shape index: {}]
  %s4 = inlined_call_operand.vmem [shape: f32[1,88], index: 4, kind: input, shape index: {}]
  %s5 = inlined_call_operand.vmem [shape: f32[1,88], index: 5, kind: input, shape index: {}]
  %s6 = inlined_call_operand.hbm [shape: f32[2,88,64], index: 6, kind: input, shape index: {}]
  %s7 = inlined_call_operand.vmem [shape: f32[1,64], index: 7, kind: input, shape index: {}]
  %s8 = inlined_call_operand.vmem [shape: f32[64,16], index: 8, kind: input, shape index: {}]
  %s9 = inlined_call_operand.vmem [shape: f32[1,16], index: 9, kind: input, shape index: {}]
  %s10 = inlined_call_operand.hbm [shape: f32[16,128], index: 10, kind: input, shape index: {}]
  %s11 = inlined_call_operand.vmem [shape: f32[1,128], index: 11, kind: input, shape index: {}]
  %s12 = inlined_call_operand.hbm [shape: f32[2,128], index: 12, kind: output, shape index: {}]
  %s13 = sld [smem:[#allocation0]]
  $region74: #{forward.1} parent=0
    _
  %s15 = ssub.s32 1, %s13
  %s16 = scalar_select 0, %s15, %s13
  $region1: #{forward.1} parent=0
    #allocation2 [shape = 'u8[163840]{0}', space=vmem, size = 0x28000, scoped, tag = 'input window, operand 1, single buffered']
    #allocation3 [shape = 's32[1]{0}', space=sflag, size = 0x4, scoped, tag = 'scoped memory for forward.1']
    #allocation4 [shape = 's32[1]{0}', space=sflag, size = 0x4, scoped, tag = 'scoped memory for forward.1']
    #allocation5 [shape = 'u8[180224]{0}', space=vmem, size = 0x2c000, scoped, tag = 'input window, operand 3, single buffered']
    #allocation6 [shape = 's32[1]{0}', space=sflag, size = 0x4, scoped, tag = 'scoped memory for forward.1']
    #allocation7 [shape = 'u8[90112]{0}', space=vmem, size = 0x16000, scoped, tag = 'input window, operand 6, single buffered']
    #allocation8 [shape = 'u8[8192]{0}', space=vmem, size = 0x2000, scoped, tag = 'input window, operand 10, single buffered']
    #allocation9 [shape = 's32[1]{0}', space=sflag, size = 0x4, scoped, tag = 'scoped memory for forward.1']
    #allocation10 [shape = 'u8[1024]{0}', space=vmem, size = 0x400, scoped, tag = 'output window, operand 0, single buffered']
    %17 = vsyncpa [#allocation3], 0
    %18 = vsyncpa [#allocation6], 0
    %19 = vsyncpa [#allocation9], 0
    %20 = vsyncpa [#allocation4], 0
    // Predicated region
    $region2: #{forward.1} parent=1 // pred_check
      _
    $region3: #{forward.1} parent=1 // pred_check_branch
      %22 = sbr.rel (0) target = $region5
    $region4: #{forward.1} parent=1 // pred_region
      _
    $region5: #{forward.1} parent=1 // pred_fallthru
      _
    // Predicated region
    $region6: #{forward.1} parent=1 // pred_check
      _
    $region7: #{forward.1} parent=1 // pred_check_branch
      %24 = sbr.rel (0) target = $region9
    $region8: #{forward.1} parent=1 // pred_region
      %s26 = ssub.s32 5120, 5120
      %27 = vsyncadd [#allocation3], %s26
      %s28 = sshll.u32 [#allocation2], 4
      %s29 = int_to_ptr.vmem [resolvable:$true] %s28
      %34 = dma.hbm_to_vmem [thread:$0]  %s1, 5120, %s29, [#allocation3], 256, 256, 16
    $region9: #{forward.1} parent=1 // pred_fallthru
      _
    // Predicated region
    $region10: #{forward.1} parent=1 // pred_check
      _
    $region11: #{forward.1} parent=1 // pred_check_branch
      %36 = sbr.rel (0) target = $region13
    $region12: #{forward.1} parent=1 // pred_region
      _
    $region13: #{forward.1} parent=1 // pred_fallthru
      _
    // Predicated region
    $region14: #{forward.1} parent=1 // pred_check
      _
    $region15: #{forward.1} parent=1 // pred_check_branch
      %38 = sbr.rel (0) target = $region17
    $region16: #{forward.1} parent=1 // pred_region
      %s40 = ssub.s32 5632, 5632
      %41 = vsyncadd [#allocation6], %s40
      %s42 = sshll.u32 [#allocation5], 4
      %s43 = int_to_ptr.vmem [resolvable:$true] %s42
      %48 = dma.hbm_to_vmem [thread:$0]  %s3, 5632, %s43, [#allocation6], 128, 128, 8
    $region17: #{forward.1} parent=1 // pred_fallthru
      _
    // Predicated region
    $region18: #{forward.1} parent=1 // pred_check
      _
    $region19: #{forward.1} parent=1 // pred_check_branch
      %50 = sbr.rel (0) target = $region21
    $region20: #{forward.1} parent=1 // pred_region
      _
    $region21: #{forward.1} parent=1 // pred_fallthru
      _
    // Predicated region
    $region22: #{forward.1} parent=1 // pred_check
      _
    $region23: #{forward.1} parent=1 // pred_check_branch
      %52 = sbr.rel (0) target = $region25
    $region24: #{forward.1} parent=1 // pred_region
      _
    $region25: #{forward.1} parent=1 // pred_fallthru
      _
    // Predicated region
    $region26: #{forward.1} parent=1 // pred_check
      _
    $region27: #{forward.1} parent=1 // pred_check_branch
      %54 = sbr.rel (0) target = $region29
    $region28: #{forward.1} parent=1 // pred_region
      %s56 = ssub.s32 2816, 2816
      %57 = vsyncadd [#allocation6], %s56
      %s58 = sshll.u32 [#allocation7], 4
      %s59 = int_to_ptr.vmem [resolvable:$true] %s58
      %64 = dma.hbm_to_vmem [thread:$0]  %s6, 2816, %s59, [#allocation6], 128, 128, 8
    $region29: #{forward.1} parent=1 // pred_fallthru
      _
    // Predicated region
    $region30: #{forward.1} parent=1 // pred_check
      _
    $region31: #{forward.1} parent=1 // pred_check_branch
      %66 = sbr.rel (0) target = $region33
    $region32: #{forward.1} parent=1 // pred_region
      _
    $region33: #{forward.1} parent=1 // pred_fallthru
      _
    // Predicated region
    $region34: #{forward.1} parent=1 // pred_check
      _
    $region35: #{forward.1} parent=1 // pred_check_branch
      %68 = sbr.rel (0) target = $region37
    $region36: #{forward.1} parent=1 // pred_region
      _
    $region37: #{forward.1} parent=1 // pred_fallthru
      _
    // Predicated region
    $region38: #{forward.1} parent=1 // pred_check
      _
    $region39: #{forward.1} parent=1 // pred_check_branch
      %70 = sbr.rel (0) target = $region41
    $region40: #{forward.1} parent=1 // pred_region
      _
    $region41: #{forward.1} parent=1 // pred_fallthru
      _
    // Predicated region
    $region42: #{forward.1} parent=1 // pred_check
      _
    $region43: #{forward.1} parent=1 // pred_check_branch
      %72 = sbr.rel (0) target = $region45
    $region44: #{forward.1} parent=1 // pred_region
      %s74 = ssub.s32 256, 256
      %75 = vsyncadd [#allocation9], %s74
      %s76 = sshll.u32 [#allocation8], 4
      %s77 = int_to_ptr.vmem [resolvable:$true] %s76
      %82 = dma.hbm_to_vmem [thread:$0]  %s10, 256, %s77, [#allocation9], 128, 128, 8
    $region45: #{forward.1} parent=1 // pred_fallthru
      _
    // Predicated region
    $region46: #{forward.1} parent=1 // pred_check
      _
    $region47: #{forward.1} parent=1 // pred_check_branch
      %84 = sbr.rel (0) target = $region49
    $region48: #{forward.1} parent=1 // pred_region
      _
    $region49: #{forward.1} parent=1 // pred_fallthru
      _
    // Predicated region
    $region50: #{forward.1} parent=1 // pred_check
      _
    $region51: #{forward.1} parent=1 // pred_check_branch
      %86 = sbr.rel (0) target = $region53
    $region52: #{forward.1} parent=1 // pred_region
      %87 = dma.done [#allocation3], 5120
    $region53: #{forward.1} parent=1 // pred_fallthru
      _
    // Predicated region
    $region54: #{forward.1} parent=1 // pred_check
      _
    $region55: #{forward.1} parent=1 // pred_check_branch
      %89 = sbr.rel (0) target = $region57
    $region56: #{forward.1} parent=1 // pred_region
      %90 = dma.done [#allocation6], 5632
    $region57: #{forward.1} parent=1 // pred_fallthru
      _
    // Predicated region
    $region58: #{forward.1} parent=1 // pred_check
      _
    $region59: #{forward.1} parent=1 // pred_check_branch
      %92 = sbr.rel (0) target = $region61
    $region60: #{forward.1} parent=1 // pred_region
      %93 = dma.done [#allocation6], 2816
    $region61: #{forward.1} parent=1 // pred_fallthru
      _
    // Predicated region
    $region62: #{forward.1} parent=1 // pred_check
      _
    $region63: #{forward.1} parent=1 // pred_check_branch
      %95 = sbr.rel (0) target = $region65
    $region64: #{forward.1} parent=1 // pred_region
      %96 = dma.done [#allocation9], 256
    $region65: #{forward.1} parent=1 // pred_fallthru
      _
    %v97 = vld [vmem:[#allocation2] sm:$0xff]
    %v98 = vld [vmem:[#allocation2 + $0x8] sm:$0xff]
    %v99 = vld [vmem:[#allocation2 + $0x10] sm:$0xff]
    %v100 = vld [vmem:[#allocation2 + $0x18] sm:$0xff]
    %v101 = vld [vmem:[#allocation2 + $0x20] sm:$0xff]
    %v102 = vld [vmem:[#allocation2 + $0x28] sm:$0xff]
    %v103 = vld [vmem:[#allocation2 + $0x30] sm:$0xff]
    %v104 = vld [vmem:[#allocation2 + $0x38] sm:$0xff]
    %v105 = vld [vmem:[#allocation2 + $0x40] sm:$0xff]
    %v106 = vld [vmem:[#allocation2 + $0x48] sm:$0xff]
    %v107 = vld [vmem:[#allocation2 + $0x50] sm:$0xff]
    %v108 = vld [vmem:[#allocation2 + $0x58] sm:$0xff]
    %v109 = vld [vmem:[#allocation2 + $0x60] sm:$0xff]
    %v110 = vld [vmem:[#allocation2 + $0x68] sm:$0xff]
    %v111 = vld [vmem:[#allocation2 + $0x70] sm:$0xff]
    %v112 = vld [vmem:[#allocation2 + $0x78] sm:$0xff]
    %v113 = vld [vmem:[#allocation2 + $0x80] sm:$0xff]
    %v114 = vld [vmem:[#allocation2 + $0x88] sm:$0xff]
    %v115 = vld [vmem:[#allocation2 + $0x90] sm:$0xff]
    %v116 = vld [vmem:[#allocation2 + $0x98] sm:$0xff]
    %s117 = scalar_lea.vmem [#allocation2], 160
    %v118 = vld [vmem:[%s117] sm:$0xff]
    %v119 = vld [vmem:[%s117 + $0x8] sm:$0xff]
    %v120 = vld [vmem:[%s117 + $0x10] sm:$0xff]
    %v121 = vld [vmem:[%s117 + $0x18] sm:$0xff]
    %v122 = vld [vmem:[%s117 + $0x20] sm:$0xff]
    %v123 = vld [vmem:[%s117 + $0x28] sm:$0xff]
    %v124 = vld [vmem:[%s117 + $0x30] sm:$0xff]
    %v125 = vld [vmem:[%s117 + $0x38] sm:$0xff]
    %v126 = vld [vmem:[%s117 + $0x40] sm:$0xff]
    %v127 = vld [vmem:[%s117 + $0x48] sm:$0xff]
    %v128 = vld [vmem:[%s117 + $0x50] sm:$0xff]
    %v129 = vld [vmem:[%s117 + $0x58] sm:$0xff]
    %v130 = vld [vmem:[%s117 + $0x60] sm:$0xff]
    %v131 = vld [vmem:[%s117 + $0x68] sm:$0xff]
    %v132 = vld [vmem:[%s117 + $0x70] sm:$0xff]
    %v133 = vld [vmem:[%s117 + $0x78] sm:$0xff]
    %v134 = vld [vmem:[%s117 + $0x80] sm:$0xff]
    %v135 = vld [vmem:[%s117 + $0x88] sm:$0xff]
    %v136 = vld [vmem:[%s117 + $0x90] sm:$0xff]
    %v137 = vld [vmem:[%s117 + $0x98] sm:$0xff]
    %v138 = vld [vmem:[#allocation5] sm:$0xff]
    %v139 = vld [vmem:[#allocation5 + $0x8] sm:$0xff]
    %v140 = vld [vmem:[#allocation5 + $0x10] sm:$0xff]
    %v141 = vld [vmem:[#allocation5 + $0x18] sm:$0xff]
    %v142 = vld [vmem:[#allocation5 + $0x20] sm:$0xff]
    %v143 = vld [vmem:[#allocation5 + $0x28] sm:$0xff]
    %v144 = vld [vmem:[#allocation5 + $0x30] sm:$0xff]
    %v145 = vld [vmem:[#allocation5 + $0x38] sm:$0xff]
    %v146 = vld [vmem:[#allocation5 + $0x40] sm:$0xff]
    %v147 = vld [vmem:[#allocation5 + $0x48] sm:$0xff]
    %v148 = vld [vmem:[#allocation5 + $0x50] sm:$0xff]
    %v149 = vld [vmem:[#allocation5 + $0x58] sm:$0xff]
    %v150 = vld [vmem:[#allocation5 + $0x60] sm:$0xff]
    %v151 = vld [vmem:[#allocation5 + $0x68] sm:$0xff]
    %v152 = vld [vmem:[#allocation5 + $0x70] sm:$0xff]
    %v153 = vld [vmem:[#allocation5 + $0x78] sm:$0xff]
    %v154 = vld [vmem:[#allocation5 + $0x80] sm:$0xff]
    %v155 = vld [vmem:[#allocation5 + $0x88] sm:$0xff]
    %v156 = vld [vmem:[#allocation5 + $0x90] sm:$0xff]
    %v157 = vld [vmem:[#allocation5 + $0x98] sm:$0xff]
    %v158 = vld [vmem:[#allocation5 + $0xa0] sm:$0xff]
    %v159 = vld [vmem:[#allocation5 + $0xa8] sm:$0xff]
    %s160 = scalar_lea.vmem [#allocation5], 176
    %v161 = vld [vmem:[%s160] sm:$0xff]
    %v162 = vld [vmem:[%s160 + $0x8] sm:$0xff]
    %v163 = vld [vmem:[%s160 + $0x10] sm:$0xff]
    %v164 = vld [vmem:[%s160 + $0x18] sm:$0xff]
    %v165 = vld [vmem:[%s160 + $0x20] sm:$0xff]
    %v166 = vld [vmem:[%s160 + $0x28] sm:$0xff]
    %v167 = vld [vmem:[%s160 + $0x30] sm:$0xff]
    %v168 = vld [vmem:[%s160 + $0x38] sm:$0xff]
    %v169 = vld [vmem:[%s160 + $0x40] sm:$0xff]
    %v170 = vld [vmem:[%s160 + $0x48] sm:$0xff]
    %v171 = vld [vmem:[%s160 + $0x50] sm:$0xff]
    %v172 = vld [vmem:[%s160 + $0x58] sm:$0xff]
    %v173 = vld [vmem:[%s160 + $0x60] sm:$0xff]
    %v174 = vld [vmem:[%s160 + $0x68] sm:$0xff]
    %v175 = vld [vmem:[%s160 + $0x70] sm:$0xff]
    %v176 = vld [vmem:[%s160 + $0x78] sm:$0xff]
    %v177 = vld [vmem:[%s160 + $0x80] sm:$0xff]
    %v178 = vld [vmem:[%s160 + $0x88] sm:$0xff]
    %v179 = vld [vmem:[%s160 + $0x90] sm:$0xff]
    %v180 = vld [vmem:[%s160 + $0x98] sm:$0xff]
    %v181 = vld [vmem:[%s160 + $0xa0] sm:$0xff]
    %v182 = vld [vmem:[%s160 + $0xa8] sm:$0xff]
    %v183 = vld [vmem:[%s2] sm:$0x3]
    %v184 = vld [vmem:[%s4] sm:$0x1]
    %v185 = vld [vmem:[%s5] sm:$0x1]
    %v186 = vld [vmem:[%s0] sm:$0x3]
    %s187 = scalar_lea.vmem %s0, 2
    %v188 = vld [vmem:[%s187] sm:$0x3]
    %vm189 = vcmask 654336
    %v191 = vsel %vm189, %v186, 0
    %193 = vmatprep.subr.mxu0 0.0
    %194 = vmatpush1.msra.mxu0 0.0
    %195 = vmatprep.subr.mxu0 0.0
    %196 = vmatpush1.msra.mxu0 0.0
    %197 = vmatprep.subr.mxu0 0.0
    %198 = vmatpush1.msra.mxu0 0.0
    %199 = vmatprep.subr.mxu0 0.0
    %200 = vmatpush1.msra.mxu0 0.0
    %201 = vmatprep.subr.mxu0 0.0
    %202 = vmatpush1.msra.mxu0 0.0
    %203 = vmatprep.subr.mxu0 0.0
    %204 = vmatpush1.msra.mxu0 0.0
    %205 = vmatprep.subr.mxu0 %v116
    %206 = vmatpush1.msra.mxu0 %v115
    %207 = vmatprep.subr.mxu0 %v114
    %208 = vmatpush1.msra.mxu0 %v113
    %209 = vmatprep.subr.mxu0 %v112
    %210 = vmatpush1.msra.mxu0 %v111
    %211 = vmatprep.subr.mxu0 %v110
    %212 = vmatpush1.msra.mxu0 %v109
    %213 = vmatprep.subr.mxu0 %v108
    %214 = vmatpush1.msra.mxu0 %v107
    %215 = vmatprep.subr.mxu0 %v106
    %216 = vmatpush1.msra.mxu0 %v105
    %217 = vmatprep.subr.mxu0 %v104
    %218 = vmatpush1.msra.mxu0 %v103
    %219 = vmatprep.subr.mxu0 %v102
    %220 = vmatpush1.msra.mxu0 %v101
    %221 = vmatprep.subr.mxu0 %v100
    %222 = vmatpush1.msra.mxu0 %v99
    %223 = vmatprep.subr.mxu0 %v98
    %224 = vmatpush1.msra.mxu0 %v97
    %225 = vmatprep.subr.mxu0 0.0
    %226 = vmatpush2.msra.mxu0 0.0
    %227 = vmatprep.subr.mxu0 0.0
    %228 = vmatpush2.msra.mxu0 0.0
    %229 = vmatprep.subr.mxu0 0.0
    %230 = vmatpush2.msra.mxu0 0.0
    %231 = vmatprep.subr.mxu0 0.0
    %232 = vmatpush2.msra.mxu0 0.0
    %233 = vmatprep.subr.mxu0 0.0
    %234 = vmatpush2.msra.mxu0 0.0
    %235 = vmatprep.subr.mxu0 0.0
    %236 = vmatpush2.msra.mxu0 0.0
    %237 = vmatprep.subr.mxu0 0.0
    %238 = vmatpush2.msra.mxu0 0.0
    %239 = vmatprep.subr.mxu0 0.0
    %240 = vmatpush2.msra.mxu0 0.0
    %241 = vmatprep.subr.mxu0 0.0
    %242 = vmatpush2.msra.mxu0 0.0
    %243 = vmatprep.subr.mxu0 0.0
    %244 = vmatpush2.msra.mxu0 0.0
    %245 = vmatprep.subr.mxu0 0.0
    %246 = vmatpush2.msra.mxu0 0.0
    %247 = vmatprep.subr.mxu0 0.0
    %248 = vmatpush2.msra.mxu0 0.0
    %249 = vmatprep.subr.mxu0 0.0
    %250 = vmatpush2.msra.mxu0 0.0
    %251 = vmatprep.subr.mxu0 0.0
    %252 = vmatpush2.msra.mxu0 0.0
    %253 = vmatprep.subr.mxu0 0.0
    %254 = vmatpush2.msra.mxu0 0.0
    %255 = vmatprep.subr.mxu0 0.0
    %256 = vmatpush2.msra.mxu0 0.0
    %257 = vmatprep.mubr.f32.mxu0 0.0
    %258 = vmatmul.mubr.f32.gmra.mxu0 %v191
    %v259 = vpop.f32.mrf.mxu0
    %v260 = vadd.f32 0.0, %v259
    %v261 = vpop.f32.mrf.mxu0
    %v262 = vadd.f32 0.0, %v261
    %263 = vdwg.mxu0
    %264 = vmatprep.subr.mxu0 0.0
    %265 = vmatpush1.msra.mxu0 0.0
    %266 = vmatprep.subr.mxu0 0.0
    %267 = vmatpush1.msra.mxu0 0.0
    %268 = vmatprep.subr.mxu0 0.0
    %269 = vmatpush1.msra.mxu0 0.0
    %270 = vmatprep.subr.mxu0 0.0
    %271 = vmatpush1.msra.mxu0 0.0
    %272 = vmatprep.subr.mxu0 0.0
    %273 = vmatpush1.msra.mxu0 0.0
    %274 = vmatprep.subr.mxu0 0.0
    %275 = vmatpush1.msra.mxu0 0.0
    %276 = vmatprep.subr.mxu0 %v137
    %277 = vmatpush1.msra.mxu0 %v136
    %278 = vmatprep.subr.mxu0 %v135
    %279 = vmatpush1.msra.mxu0 %v134
    %280 = vmatprep.subr.mxu0 %v133
    %281 = vmatpush1.msra.mxu0 %v132
    %282 = vmatprep.subr.mxu0 %v131
    %283 = vmatpush1.msra.mxu0 %v130
    %284 = vmatprep.subr.mxu0 %v129
    %285 = vmatpush1.msra.mxu0 %v128
    %286 = vmatprep.subr.mxu0 %v127
    %287 = vmatpush1.msra.mxu0 %v126
    %288 = vmatprep.subr.mxu0 %v125
    %289 = vmatpush1.msra.mxu0 %v124
    %290 = vmatprep.subr.mxu0 %v123
    %291 = vmatpush1.msra.mxu0 %v122
    %292 = vmatprep.subr.mxu0 %v121
    %293 = vmatpush1.msra.mxu0 %v120
    %294 = vmatprep.subr.mxu0 %v119
    %295 = vmatpush1.msra.mxu0 %v118
    %296 = vmatprep.subr.mxu0 0.0
    %297 = vmatpush2.msra.mxu0 0.0
    %298 = vmatprep.subr.mxu0 0.0
    %299 = vmatpush2.msra.mxu0 0.0
    %300 = vmatprep.subr.mxu0 0.0
    %301 = vmatpush2.msra.mxu0 0.0
    %302 = vmatprep.subr.mxu0 0.0
    %303 = vmatpush2.msra.mxu0 0.0
    %304 = vmatprep.subr.mxu0 0.0
    %305 = vmatpush2.msra.mxu0 0.0
    %306 = vmatprep.subr.mxu0 0.0
    %307 = vmatpush2.msra.mxu0 0.0
    %308 = vmatprep.subr.mxu0 0.0
    %309 = vmatpush2.msra.mxu0 0.0
    %310 = vmatprep.subr.mxu0 0.0
    %311 = vmatpush2.msra.mxu0 0.0
    %312 = vmatprep.subr.mxu0 0.0
    %313 = vmatpush2.msra.mxu0 0.0
    %314 = vmatprep.subr.mxu0 0.0
    %315 = vmatpush2.msra.mxu0 0.0
    %316 = vmatprep.subr.mxu0 0.0
    %317 = vmatpush2.msra.mxu0 0.0
    %318 = vmatprep.subr.mxu0 0.0
    %319 = vmatpush2.msra.mxu0 0.0
    %320 = vmatprep.subr.mxu0 0.0
    %321 = vmatpush2.msra.mxu0 0.0
    %322 = vmatprep.subr.mxu0 0.0
    %323 = vmatpush2.msra.mxu0 0.0
    %324 = vmatprep.subr.mxu0 0.0
    %325 = vmatpush2.msra.mxu0 0.0
    %326 = vmatprep.subr.mxu0 0.0
    %327 = vmatpush2.msra.mxu0 0.0
    %328 = vmatprep.mubr.f32.mxu0 0.0
    %329 = vmatmul.mubr.f32.gmra.mxu0 %v191
    %v330 = vpop.f32.mrf.mxu0
    %v331 = vadd.f32 0.0, %v330
    %v332 = vpop.f32.mrf.mxu0
    %v333 = vadd.f32 0.0, %v332
    %334 = vdwg.mxu0
    %v335 = vmax.f32 %v260, %v331
    %v336 = vmax.f32 %v262, %v333
    %v338 = vsel %vm189, %v188, 0
    %340 = vmatprep.subr.mxu0 0.0
    %341 = vmatpush1.msra.mxu0 0.0
    %342 = vmatprep.subr.mxu0 0.0
    %343 = vmatpush1.msra.mxu0 0.0
    %344 = vmatprep.subr.mxu0 0.0
    %345 = vmatpush1.msra.mxu0 0.0
    %346 = vmatprep.subr.mxu0 0.0
    %347 = vmatpush1.msra.mxu0 0.0
    %348 = vmatprep.subr.mxu0 0.0
    %349 = vmatpush1.msra.mxu0 0.0
    %350 = vmatprep.subr.mxu0 0.0
    %351 = vmatpush1.msra.mxu0 0.0
    %352 = vmatprep.subr.mxu0 %v116
    %353 = vmatpush1.msra.mxu0 %v115
    %354 = vmatprep.subr.mxu0 %v114
    %355 = vmatpush1.msra.mxu0 %v113
    %356 = vmatprep.subr.mxu0 %v112
    %357 = vmatpush1.msra.mxu0 %v111
    %358 = vmatprep.subr.mxu0 %v110
    %359 = vmatpush1.msra.mxu0 %v109
    %360 = vmatprep.subr.mxu0 %v108
    %361 = vmatpush1.msra.mxu0 %v107
    %362 = vmatprep.subr.mxu0 %v106
    %363 = vmatpush1.msra.mxu0 %v105
    %364 = vmatprep.subr.mxu0 %v104
    %365 = vmatpush1.msra.mxu0 %v103
    %366 = vmatprep.subr.mxu0 %v102
    %367 = vmatpush1.msra.mxu0 %v101
    %368 = vmatprep.subr.mxu0 %v100
    %369 = vmatpush1.msra.mxu0 %v99
    %370 = vmatprep.subr.mxu0 %v98
    %371 = vmatpush1.msra.mxu0 %v97
    %372 = vmatprep.subr.mxu0 0.0
    %373 = vmatpush2.msra.mxu0 0.0
    %374 = vmatprep.subr.mxu0 0.0
    %375 = vmatpush2.msra.mxu0 0.0
    %376 = vmatprep.subr.mxu0 0.0
    %377 = vmatpush2.msra.mxu0 0.0
    %378 = vmatprep.subr.mxu0 0.0
    %379 = vmatpush2.msra.mxu0 0.0
    %380 = vmatprep.subr.mxu0 0.0
    %381 = vmatpush2.msra.mxu0 0.0
    %382 = vmatprep.subr.mxu0 0.0
    %383 = vmatpush2.msra.mxu0 0.0
    %384 = vmatprep.subr.mxu0 0.0
    %385 = vmatpush2.msra.mxu0 0.0
    %386 = vmatprep.subr.mxu0 0.0
    %387 = vmatpush2.msra.mxu0 0.0
    %388 = vmatprep.subr.mxu0 0.0
    %389 = vmatpush2.msra.mxu0 0.0
    %390 = vmatprep.subr.mxu0 0.0
    %391 = vmatpush2.msra.mxu0 0.0
    %392 = vmatprep.subr.mxu0 0.0
    %393 = vmatpush2.msra.mxu0 0.0
    %394 = vmatprep.subr.mxu0 0.0
    %395 = vmatpush2.msra.mxu0 0.0
    %396 = vmatprep.subr.mxu0 0.0
    %397 = vmatpush2.msra.mxu0 0.0
    %398 = vmatprep.subr.mxu0 0.0
    %399 = vmatpush2.msra.mxu0 0.0
    %400 = vmatprep.subr.mxu0 0.0
    %401 = vmatpush2.msra.mxu0 0.0
    %402 = vmatprep.subr.mxu0 0.0
    %403 = vmatpush2.msra.mxu0 0.0
    %404 = vmatprep.mubr.f32.mxu0 0.0
    %405 = vmatmul.mubr.f32.gmra.mxu0 %v338
    %v406 = vpop.f32.mrf.mxu0
    %v407 = vadd.f32 0.0, %v406
    %v408 = vpop.f32.mrf.mxu0
    %v409 = vadd.f32 0.0, %v408
    %410 = vdwg.mxu0
    %411 = vmatprep.subr.mxu0 0.0
    %412 = vmatpush1.msra.mxu0 0.0
    %413 = vmatprep.subr.mxu0 0.0
    %414 = vmatpush1.msra.mxu0 0.0
    %415 = vmatprep.subr.mxu0 0.0
    %416 = vmatpush1.msra.mxu0 0.0
    %417 = vmatprep.subr.mxu0 0.0
    %418 = vmatpush1.msra.mxu0 0.0
    %419 = vmatprep.subr.mxu0 0.0
    %420 = vmatpush1.msra.mxu0 0.0
    %421 = vmatprep.subr.mxu0 0.0
    %422 = vmatpush1.msra.mxu0 0.0
    %423 = vmatprep.subr.mxu0 %v137
    %424 = vmatpush1.msra.mxu0 %v136
    %425 = vmatprep.subr.mxu0 %v135
    %426 = vmatpush1.msra.mxu0 %v134
    %427 = vmatprep.subr.mxu0 %v133
    %428 = vmatpush1.msra.mxu0 %v132
    %429 = vmatprep.subr.mxu0 %v131
    %430 = vmatpush1.msra.mxu0 %v130
    %431 = vmatprep.subr.mxu0 %v129
    %432 = vmatpush1.msra.mxu0 %v128
    %433 = vmatprep.subr.mxu0 %v127
    %434 = vmatpush1.msra.mxu0 %v126
    %435 = vmatprep.subr.mxu0 %v125
    %436 = vmatpush1.msra.mxu0 %v124
    %437 = vmatprep.subr.mxu0 %v123
    %438 = vmatpush1.msra.mxu0 %v122
    %439 = vmatprep.subr.mxu0 %v121
    %440 = vmatpush1.msra.mxu0 %v120
    %441 = vmatprep.subr.mxu0 %v119
    %442 = vmatpush1.msra.mxu0 %v118
    %443 = vmatprep.subr.mxu0 0.0
    %444 = vmatpush2.msra.mxu0 0.0
    %445 = vmatprep.subr.mxu0 0.0
    %446 = vmatpush2.msra.mxu0 0.0
    %447 = vmatprep.subr.mxu0 0.0
    %448 = vmatpush2.msra.mxu0 0.0
    %449 = vmatprep.subr.mxu0 0.0
    %450 = vmatpush2.msra.mxu0 0.0
    %451 = vmatprep.subr.mxu0 0.0
    %452 = vmatpush2.msra.mxu0 0.0
    %453 = vmatprep.subr.mxu0 0.0
    %454 = vmatpush2.msra.mxu0 0.0
    %455 = vmatprep.subr.mxu0 0.0
    %456 = vmatpush2.msra.mxu0 0.0
    %457 = vmatprep.subr.mxu0 0.0
    %458 = vmatpush2.msra.mxu0 0.0
    %459 = vmatprep.subr.mxu0 0.0
    %460 = vmatpush2.msra.mxu0 0.0
    %461 = vmatprep.subr.mxu0 0.0
    %462 = vmatpush2.msra.mxu0 0.0
    %463 = vmatprep.subr.mxu0 0.0
    %464 = vmatpush2.msra.mxu0 0.0
    %465 = vmatprep.subr.mxu0 0.0
    %466 = vmatpush2.msra.mxu0 0.0
    %467 = vmatprep.subr.mxu0 0.0
    %468 = vmatpush2.msra.mxu0 0.0
    %469 = vmatprep.subr.mxu0 0.0
    %470 = vmatpush2.msra.mxu0 0.0
    %471 = vmatprep.subr.mxu0 0.0
    %472 = vmatpush2.msra.mxu0 0.0
    %473 = vmatprep.subr.mxu0 0.0
    %474 = vmatpush2.msra.mxu0 0.0
    %475 = vmatprep.mubr.f32.mxu0 0.0
    %476 = vmatmul.mubr.f32.gmra.mxu0 %v338
    %v477 = vpop.f32.mrf.mxu0
    %v478 = vadd.f32 0.0, %v477
    %v479 = vpop.f32.mrf.mxu0
    %v480 = vadd.f32 0.0, %v479
    %481 = vdwg.mxu0
    %v482 = vmax.f32 %v407, %v478
    %v483 = vmax.f32 %v409, %v480
    %v484 = vmax.f32 %v335, %v482
    %v485 = vmax.f32 %v336, %v483
    %v487 = vlaneseq
    %v488 = vshrl.u32 %v487, 7
    %v489 = vsub.s32 0, %v488
    %v490 = vrot.slane %v183, %v489
    %v491 = vlaneseq
    %v492 = vshrl.u32 %v491, 7
    %v493 = vsub.s32 1, %v492
    %v494 = vrot.slane %v183, %v493
    %v497 = vadd.f32 %v484, %v490
    %v498 = vadd.f32 %v485, %v494
    %v499 = vmax.f32 %v497, 0.0
    %v500 = vmax.f32 %v498, 0.0
    %vm501 = vcmask 392192
    %v503 = vsel %vm501, %v500, 0
    %505 = vmatprep.subr.mxu0 0.0
    %506 = vmatpush1.msra.mxu0 %v153
    %507 = vmatprep.subr.mxu0 0.0
    %508 = vmatpush1.msra.mxu0 %v152
    %509 = vmatprep.subr.mxu0 0.0
    %510 = vmatpush1.msra.mxu0 %v151
    %511 = vmatprep.subr.mxu0 0.0
    %512 = vmatpush1.msra.mxu0 %v150
    %513 = vmatprep.subr.mxu0 0.0
    %514 = vmatpush1.msra.mxu0 %v149
    %515 = vmatprep.subr.mxu0 0.0
    %516 = vmatpush1.msra.mxu0 %v148
    %517 = vmatprep.subr.mxu0 0.0
    %518 = vmatpush1.msra.mxu0 %v147
    %519 = vmatprep.subr.mxu0 0.0
    %520 = vmatpush1.msra.mxu0 %v146
    %521 = vmatprep.subr.mxu0 0.0
    %522 = vmatpush1.msra.mxu0 %v145
    %523 = vmatprep.subr.mxu0 0.0
    %524 = vmatpush1.msra.mxu0 %v144
    %525 = vmatprep.subr.mxu0 0.0
    %526 = vmatpush1.msra.mxu0 %v143
    %527 = vmatprep.subr.mxu0 0.0
    %528 = vmatpush1.msra.mxu0 %v142
    %529 = vmatprep.subr.mxu0 0.0
    %530 = vmatpush1.msra.mxu0 %v141
    %531 = vmatprep.subr.mxu0 0.0
    %532 = vmatpush1.msra.mxu0 %v140
    %533 = vmatprep.subr.mxu0 0.0
    %534 = vmatpush1.msra.mxu0 %v139
    %535 = vmatprep.subr.mxu0 0.0
    %536 = vmatpush1.msra.mxu0 %v138
    %537 = vmatprep.subr.mxu0 0.0
    %538 = vmatpush2.msra.mxu0 0.0
    %539 = vmatprep.subr.mxu0 0.0
    %540 = vmatpush2.msra.mxu0 0.0
    %541 = vmatprep.subr.mxu0 0.0
    %542 = vmatpush2.msra.mxu0 0.0
    %543 = vmatprep.subr.mxu0 0.0
    %544 = vmatpush2.msra.mxu0 0.0
    %545 = vmatprep.subr.mxu0 0.0
    %546 = vmatpush2.msra.mxu0 0.0
    %547 = vmatprep.subr.mxu0 0.0
    %548 = vmatpush2.msra.mxu0 0.0
    %549 = vmatprep.subr.mxu0 0.0
    %550 = vmatpush2.msra.mxu0 0.0
    %551 = vmatprep.subr.mxu0 0.0
    %552 = vmatpush2.msra.mxu0 0.0
    %553 = vmatprep.subr.mxu0 0.0
    %554 = vmatpush2.msra.mxu0 0.0
    %555 = vmatprep.subr.mxu0 0.0
    %556 = vmatpush2.msra.mxu0 0.0
    %557 = vmatprep.subr.mxu0 0.0
    %558 = vmatpush2.msra.mxu0 %v159
    %559 = vmatprep.subr.mxu0 0.0
    %560 = vmatpush2.msra.mxu0 %v158
    %561 = vmatprep.subr.mxu0 0.0
    %562 = vmatpush2.msra.mxu0 %v157
    %563 = vmatprep.subr.mxu0 0.0
    %564 = vmatpush2.msra.mxu0 %v156
    %565 = vmatprep.subr.mxu0 0.0
    %566 = vmatpush2.msra.mxu0 %v155
    %567 = vmatprep.subr.mxu0 0.0
    %568 = vmatpush2.msra.mxu0 %v154
    %569 = vmatprep.mubr.f32.mxu0 %v503
    %570 = vmatmul.mubr.f32.gmra.mxu0 %v499
    %v571 = vpop.f32.mrf.mxu0
    %v572 = vadd.f32 0.0, %v571
    %v573 = vpop.f32.mrf.mxu0
    %574 = vdwg.mxu0
    %575 = vmatprep.subr.mxu0 0.0
    %576 = vmatpush1.msra.mxu0 %v176
    %577 = vmatprep.subr.mxu0 0.0
    %578 = vmatpush1.msra.mxu0 %v175
    %579 = vmatprep.subr.mxu0 0.0
    %580 = vmatpush1.msra.mxu0 %v174
    %581 = vmatprep.subr.mxu0 0.0
    %582 = vmatpush1.msra.mxu0 %v173
    %583 = vmatprep.subr.mxu0 0.0
    %584 = vmatpush1.msra.mxu0 %v172
    %585 = vmatprep.subr.mxu0 0.0
    %586 = vmatpush1.msra.mxu0 %v171
    %587 = vmatprep.subr.mxu0 0.0
    %588 = vmatpush1.msra.mxu0 %v170
    %589 = vmatprep.subr.mxu0 0.0
    %590 = vmatpush1.msra.mxu0 %v169
    %591 = vmatprep.subr.mxu0 0.0
    %592 = vmatpush1.msra.mxu0 %v168
    %593 = vmatprep.subr.mxu0 0.0
    %594 = vmatpush1.msra.mxu0 %v167
    %595 = vmatprep.subr.mxu0 0.0
    %596 = vmatpush1.msra.mxu0 %v166
    %597 = vmatprep.subr.mxu0 0.0
    %598 = vmatpush1.msra.mxu0 %v165
    %599 = vmatprep.subr.mxu0 0.0
    %600 = vmatpush1.msra.mxu0 %v164
    %601 = vmatprep.subr.mxu0 0.0
    %602 = vmatpush1.msra.mxu0 %v163
    %603 = vmatprep.subr.mxu0 0.0
    %604 = vmatpush1.msra.mxu0 %v162
    %605 = vmatprep.subr.mxu0 0.0
    %606 = vmatpush1.msra.mxu0 %v161
    %607 = vmatprep.subr.mxu0 0.0
    %608 = vmatpush2.msra.mxu0 0.0
    %609 = vmatprep.subr.mxu0 0.0
    %610 = vmatpush2.msra.mxu0 0.0
    %611 = vmatprep.subr.mxu0 0.0
    %612 = vmatpush2.msra.mxu0 0.0
    %613 = vmatprep.subr.mxu0 0.0
    %614 = vmatpush2.msra.mxu0 0.0
    %615 = vmatprep.subr.mxu0 0.0
    %616 = vmatpush2.msra.mxu0 0.0
    %617 = vmatprep.subr.mxu0 0.0
    %618 = vmatpush2.msra.mxu0 0.0
    %619 = vmatprep.subr.mxu0 0.0
    %620 = vmatpush2.msra.mxu0 0.0
    %621 = vmatprep.subr.mxu0 0.0
    %622 = vmatpush2.msra.mxu0 0.0
    %623 = vmatprep.subr.mxu0 0.0
    %624 = vmatpush2.msra.mxu0 0.0
    %625 = vmatprep.subr.mxu0 0.0
    %626 = vmatpush2.msra.mxu0 0.0
    %627 = vmatprep.subr.mxu0 0.0
    %628 = vmatpush2.msra.mxu0 %v182
    %629 = vmatprep.subr.mxu0 0.0
    %630 = vmatpush2.msra.mxu0 %v181
    %631 = vmatprep.subr.mxu0 0.0
    %632 = vmatpush2.msra.mxu0 %v180
    %633 = vmatprep.subr.mxu0 0.0
    %634 = vmatpush2.msra.mxu0 %v179
    %635 = vmatprep.subr.mxu0 0.0
    %636 = vmatpush2.msra.mxu0 %v178
    %637 = vmatprep.subr.mxu0 0.0
    %638 = vmatpush2.msra.mxu0 %v177
    %639 = vmatprep.mubr.f32.mxu0 %v503
    %640 = vmatmul.mubr.f32.gmra.mxu0 %v499
    %v641 = vpop.f32.mrf.mxu0
    %v642 = vadd.f32 0.0, %v641
    %v643 = vpop.f32.mrf.mxu0
    %644 = vdwg.mxu0
    %v645 = vmax.f32 %v572, %v642
    %v647 = vlaneseq
    %v648 = vshrl.u32 %v647, 7
    %v649 = vsub.s32 0, %v648
    %v650 = vrot.slane %v184, %v649
    %v652 = vadd.f32 %v645, %v650
    %v653 = vmax.f32 %v652, 0.0
    %v655 = vlaneseq
    %v656 = vshrl.u32 %v655, 7
    %v657 = vsub.s32 0, %v656
    %v658 = vrot.slane %v185, %v657
    %v660 = vmax.f32 %v653, %v658
    %s661 = scalar_lea.vmem %s0, 4
    %v662 = vld [vmem:[%s661] sm:$0x3]
    %s663 = scalar_lea.vmem %s0, 6
    %v664 = vld [vmem:[%s663] sm:$0x3]
    %v666 = vsel %vm189, %v662, 0
    %668 = vmatprep.subr.mxu0 0.0
    %669 = vmatpush1.msra.mxu0 0.0
    %670 = vmatprep.subr.mxu0 0.0
    %671 = vmatpush1.msra.mxu0 0.0
    %672 = vmatprep.subr.mxu0 0.0
    %673 = vmatpush1.msra.mxu0 0.0
    %674 = vmatprep.subr.mxu0 0.0
    %675 = vmatpush1.msra.mxu0 0.0
    %676 = vmatprep.subr.mxu0 0.0
    %677 = vmatpush1.msra.mxu0 0.0
    %678 = vmatprep.subr.mxu0 0.0
    %679 = vmatpush1.msra.mxu0 0.0
    %680 = vmatprep.subr.mxu0 %v116
    %681 = vmatpush1.msra.mxu0 %v115
    %682 = vmatprep.subr.mxu0 %v114
    %683 = vmatpush1.msra.mxu0 %v113
    %684 = vmatprep.subr.mxu0 %v112
    %685 = vmatpush1.msra.mxu0 %v111
    %686 = vmatprep.subr.mxu0 %v110
    %687 = vmatpush1.msra.mxu0 %v109
    %688 = vmatprep.subr.mxu0 %v108
    %689 = vmatpush1.msra.mxu0 %v107
    %690 = vmatprep.subr.mxu0 %v106
    %691 = vmatpush1.msra.mxu0 %v105
    %692 = vmatprep.subr.mxu0 %v104
    %693 = vmatpush1.msra.mxu0 %v103
    %694 = vmatprep.subr.mxu0 %v102
    %695 = vmatpush1.msra.mxu0 %v101
    %696 = vmatprep.subr.mxu0 %v100
    %697 = vmatpush1.msra.mxu0 %v99
    %698 = vmatprep.subr.mxu0 %v98
    %699 = vmatpush1.msra.mxu0 %v97
    %700 = vmatprep.subr.mxu0 0.0
    %701 = vmatpush2.msra.mxu0 0.0
    %702 = vmatprep.subr.mxu0 0.0
    %703 = vmatpush2.msra.mxu0 0.0
    %704 = vmatprep.subr.mxu0 0.0
    %705 = vmatpush2.msra.mxu0 0.0
    %706 = vmatprep.subr.mxu0 0.0
    %707 = vmatpush2.msra.mxu0 0.0
    %708 = vmatprep.subr.mxu0 0.0
    %709 = vmatpush2.msra.mxu0 0.0
    %710 = vmatprep.subr.mxu0 0.0
    %711 = vmatpush2.msra.mxu0 0.0
    %712 = vmatprep.subr.mxu0 0.0
    %713 = vmatpush2.msra.mxu0 0.0
    %714 = vmatprep.subr.mxu0 0.0
    %715 = vmatpush2.msra.mxu0 0.0
    %716 = vmatprep.subr.mxu0 0.0
    %717 = vmatpush2.msra.mxu0 0.0
    %718 = vmatprep.subr.mxu0 0.0
    %719 = vmatpush2.msra.mxu0 0.0
    %720 = vmatprep.subr.mxu0 0.0
    %721 = vmatpush2.msra.mxu0 0.0
    %722 = vmatprep.subr.mxu0 0.0
    %723 = vmatpush2.msra.mxu0 0.0
    %724 = vmatprep.subr.mxu0 0.0
    %725 = vmatpush2.msra.mxu0 0.0
    %726 = vmatprep.subr.mxu0 0.0
    %727 = vmatpush2.msra.mxu0 0.0
    %728 = vmatprep.subr.mxu0 0.0
    %729 = vmatpush2.msra.mxu0 0.0
    %730 = vmatprep.subr.mxu0 0.0
    %731 = vmatpush2.msra.mxu0 0.0
    %732 = vmatprep.mubr.f32.mxu0 0.0
    %733 = vmatmul.mubr.f32.gmra.mxu0 %v666
    %v734 = vpop.f32.mrf.mxu0
    %v735 = vadd.f32 0.0, %v734
    %v736 = vpop.f32.mrf.mxu0
    %v737 = vadd.f32 0.0, %v736
    %738 = vdwg.mxu0
    %739 = vmatprep.subr.mxu0 0.0
    %740 = vmatpush1.msra.mxu0 0.0
    %741 = vmatprep.subr.mxu0 0.0
    %742 = vmatpush1.msra.mxu0 0.0
    %743 = vmatprep.subr.mxu0 0.0
    %744 = vmatpush1.msra.mxu0 0.0
    %745 = vmatprep.subr.mxu0 0.0
    %746 = vmatpush1.msra.mxu0 0.0
    %747 = vmatprep.subr.mxu0 0.0
    %748 = vmatpush1.msra.mxu0 0.0
    %749 = vmatprep.subr.mxu0 0.0
    %750 = vmatpush1.msra.mxu0 0.0
    %751 = vmatprep.subr.mxu0 %v137
    %752 = vmatpush1.msra.mxu0 %v136
    %753 = vmatprep.subr.mxu0 %v135
    %754 = vmatpush1.msra.mxu0 %v134
    %755 = vmatprep.subr.mxu0 %v133
    %756 = vmatpush1.msra.mxu0 %v132
    %757 = vmatprep.subr.mxu0 %v131
    %758 = vmatpush1.msra.mxu0 %v130
    %759 = vmatprep.subr.mxu0 %v129
    %760 = vmatpush1.msra.mxu0 %v128
    %761 = vmatprep.subr.mxu0 %v127
    %762 = vmatpush1.msra.mxu0 %v126
    %763 = vmatprep.subr.mxu0 %v125
    %764 = vmatpush1.msra.mxu0 %v124
    %765 = vmatprep.subr.mxu0 %v123
    %766 = vmatpush1.msra.mxu0 %v122
    %767 = vmatprep.subr.mxu0 %v121
    %768 = vmatpush1.msra.mxu0 %v120
    %769 = vmatprep.subr.mxu0 %v119
    %770 = vmatpush1.msra.mxu0 %v118
    %771 = vmatprep.subr.mxu0 0.0
    %772 = vmatpush2.msra.mxu0 0.0
    %773 = vmatprep.subr.mxu0 0.0
    %774 = vmatpush2.msra.mxu0 0.0
    %775 = vmatprep.subr.mxu0 0.0
    %776 = vmatpush2.msra.mxu0 0.0
    %777 = vmatprep.subr.mxu0 0.0
    %778 = vmatpush2.msra.mxu0 0.0
    %779 = vmatprep.subr.mxu0 0.0
    %780 = vmatpush2.msra.mxu0 0.0
    %781 = vmatprep.subr.mxu0 0.0
    %782 = vmatpush2.msra.mxu0 0.0
    %783 = vmatprep.subr.mxu0 0.0
    %784 = vmatpush2.msra.mxu0 0.0
    %785 = vmatprep.subr.mxu0 0.0
    %786 = vmatpush2.msra.mxu0 0.0
    %787 = vmatprep.subr.mxu0 0.0
    %788 = vmatpush2.msra.mxu0 0.0
    %789 = vmatprep.subr.mxu0 0.0
    %790 = vmatpush2.msra.mxu0 0.0
    %791 = vmatprep.subr.mxu0 0.0
    %792 = vmatpush2.msra.mxu0 0.0
    %793 = vmatprep.subr.mxu0 0.0
    %794 = vmatpush2.msra.mxu0 0.0
    %795 = vmatprep.subr.mxu0 0.0
    %796 = vmatpush2.msra.mxu0 0.0
    %797 = vmatprep.subr.mxu0 0.0
    %798 = vmatpush2.msra.mxu0 0.0
    %799 = vmatprep.subr.mxu0 0.0
    %800 = vmatpush2.msra.mxu0 0.0
    %801 = vmatprep.subr.mxu0 0.0
    %802 = vmatpush2.msra.mxu0 0.0
    %803 = vmatprep.mubr.f32.mxu0 0.0
    %804 = vmatmul.mubr.f32.gmra.mxu0 %v666
    %v805 = vpop.f32.mrf.mxu0
    %v806 = vadd.f32 0.0, %v805
    %v807 = vpop.f32.mrf.mxu0
    %v808 = vadd.f32 0.0, %v807
    %809 = vdwg.mxu0
    %v810 = vmax.f32 %v735, %v806
    %v811 = vmax.f32 %v737, %v808
    %v813 = vsel %vm189, %v664, 0
    %815 = vmatprep.subr.mxu0 0.0
    %816 = vmatpush1.msra.mxu0 0.0
    %817 = vmatprep.subr.mxu0 0.0
    %818 = vmatpush1.msra.mxu0 0.0
    %819 = vmatprep.subr.mxu0 0.0
    %820 = vmatpush1.msra.mxu0 0.0
    %821 = vmatprep.subr.mxu0 0.0
    %822 = vmatpush1.msra.mxu0 0.0
    %823 = vmatprep.subr.mxu0 0.0
    %824 = vmatpush1.msra.mxu0 0.0
    %825 = vmatprep.subr.mxu0 0.0
    %826 = vmatpush1.msra.mxu0 0.0
    %827 = vmatprep.subr.mxu0 %v116
    %828 = vmatpush1.msra.mxu0 %v115
    %829 = vmatprep.subr.mxu0 %v114
    %830 = vmatpush1.msra.mxu0 %v113
    %831 = vmatprep.subr.mxu0 %v112
    %832 = vmatpush1.msra.mxu0 %v111
    %833 = vmatprep.subr.mxu0 %v110
    %834 = vmatpush1.msra.mxu0 %v109
    %835 = vmatprep.subr.mxu0 %v108
    %836 = vmatpush1.msra.mxu0 %v107
    %837 = vmatprep.subr.mxu0 %v106
    %838 = vmatpush1.msra.mxu0 %v105
    %839 = vmatprep.subr.mxu0 %v104
    %840 = vmatpush1.msra.mxu0 %v103
    %841 = vmatprep.subr.mxu0 %v102
    %842 = vmatpush1.msra.mxu0 %v101
    %843 = vmatprep.subr.mxu0 %v100
    %844 = vmatpush1.msra.mxu0 %v99
    %845 = vmatprep.subr.mxu0 %v98
    %846 = vmatpush1.msra.mxu0 %v97
    %847 = vmatprep.subr.mxu0 0.0
    %848 = vmatpush2.msra.mxu0 0.0
    %849 = vmatprep.subr.mxu0 0.0
    %850 = vmatpush2.msra.mxu0 0.0
    %851 = vmatprep.subr.mxu0 0.0
    %852 = vmatpush2.msra.mxu0 0.0
    %853 = vmatprep.subr.mxu0 0.0
    %854 = vmatpush2.msra.mxu0 0.0
    %855 = vmatprep.subr.mxu0 0.0
    %856 = vmatpush2.msra.mxu0 0.0
    %857 = vmatprep.subr.mxu0 0.0
    %858 = vmatpush2.msra.mxu0 0.0
    %859 = vmatprep.subr.mxu0 0.0
    %860 = vmatpush2.msra.mxu0 0.0
    %861 = vmatprep.subr.mxu0 0.0
    %862 = vmatpush2.msra.mxu0 0.0
    %863 = vmatprep.subr.mxu0 0.0
    %864 = vmatpush2.msra.mxu0 0.0
    %865 = vmatprep.subr.mxu0 0.0
    %866 = vmatpush2.msra.mxu0 0.0
    %867 = vmatprep.subr.mxu0 0.0
    %868 = vmatpush2.msra.mxu0 0.0
    %869 = vmatprep.subr.mxu0 0.0
    %870 = vmatpush2.msra.mxu0 0.0
    %871 = vmatprep.subr.mxu0 0.0
    %872 = vmatpush2.msra.mxu0 0.0
    %873 = vmatprep.subr.mxu0 0.0
    %874 = vmatpush2.msra.mxu0 0.0
    %875 = vmatprep.subr.mxu0 0.0
    %876 = vmatpush2.msra.mxu0 0.0
    %877 = vmatprep.subr.mxu0 0.0
    %878 = vmatpush2.msra.mxu0 0.0
    %879 = vmatprep.mubr.f32.mxu0 0.0
    %880 = vmatmul.mubr.f32.gmra.mxu0 %v813
    %v881 = vpop.f32.mrf.mxu0
    %v882 = vadd.f32 0.0, %v881
    %v883 = vpop.f32.mrf.mxu0
    %v884 = vadd.f32 0.0, %v883
    %885 = vdwg.mxu0
    %886 = vmatprep.subr.mxu0 0.0
    %887 = vmatpush1.msra.mxu0 0.0
    %888 = vmatprep.subr.mxu0 0.0
    %889 = vmatpush1.msra.mxu0 0.0
    %890 = vmatprep.subr.mxu0 0.0
    %891 = vmatpush1.msra.mxu0 0.0
    %892 = vmatprep.subr.mxu0 0.0
    %893 = vmatpush1.msra.mxu0 0.0
    %894 = vmatprep.subr.mxu0 0.0
    %895 = vmatpush1.msra.mxu0 0.0
    %896 = vmatprep.subr.mxu0 0.0
    %897 = vmatpush1.msra.mxu0 0.0
    %898 = vmatprep.subr.mxu0 %v137
    %899 = vmatpush1.msra.mxu0 %v136
    %900 = vmatprep.subr.mxu0 %v135
    %901 = vmatpush1.msra.mxu0 %v134
    %902 = vmatprep.subr.mxu0 %v133
    %903 = vmatpush1.msra.mxu0 %v132
    %904 = vmatprep.subr.mxu0 %v131
    %905 = vmatpush1.msra.mxu0 %v130
    %906 = vmatprep.subr.mxu0 %v129
    %907 = vmatpush1.msra.mxu0 %v128
    %908 = vmatprep.subr.mxu0 %v127
    %909 = vmatpush1.msra.mxu0 %v126
    %910 = vmatprep.subr.mxu0 %v125
    %911 = vmatpush1.msra.mxu0 %v124
    %912 = vmatprep.subr.mxu0 %v123
    %913 = vmatpush1.msra.mxu0 %v122
    %914 = vmatprep.subr.mxu0 %v121
    %915 = vmatpush1.msra.mxu0 %v120
    %916 = vmatprep.subr.mxu0 %v119
    %917 = vmatpush1.msra.mxu0 %v118
    %918 = vmatprep.subr.mxu0 0.0
    %919 = vmatpush2.msra.mxu0 0.0
    %920 = vmatprep.subr.mxu0 0.0
    %921 = vmatpush2.msra.mxu0 0.0
    %922 = vmatprep.subr.mxu0 0.0
    %923 = vmatpush2.msra.mxu0 0.0
    %924 = vmatprep.subr.mxu0 0.0
    %925 = vmatpush2.msra.mxu0 0.0
    %926 = vmatprep.subr.mxu0 0.0
    %927 = vmatpush2.msra.mxu0 0.0
    %928 = vmatprep.subr.mxu0 0.0
    %929 = vmatpush2.msra.mxu0 0.0
    %930 = vmatprep.subr.mxu0 0.0
    %931 = vmatpush2.msra.mxu0 0.0
    %932 = vmatprep.subr.mxu0 0.0
    %933 = vmatpush2.msra.mxu0 0.0
    %934 = vmatprep.subr.mxu0 0.0
    %935 = vmatpush2.msra.mxu0 0.0
    %936 = vmatprep.subr.mxu0 0.0
    %937 = vmatpush2.msra.mxu0 0.0
    %938 = vmatprep.subr.mxu0 0.0
    %939 = vmatpush2.msra.mxu0 0.0
    %940 = vmatprep.subr.mxu0 0.0
    %941 = vmatpush2.msra.mxu0 0.0
    %942 = vmatprep.subr.mxu0 0.0
    %943 = vmatpush2.msra.mxu0 0.0
    %944 = vmatprep.subr.mxu0 0.0
    %945 = vmatpush2.msra.mxu0 0.0
    %946 = vmatprep.subr.mxu0 0.0
    %947 = vmatpush2.msra.mxu0 0.0
    %948 = vmatprep.subr.mxu0 0.0
    %949 = vmatpush2.msra.mxu0 0.0
    %950 = vmatprep.mubr.f32.mxu0 0.0
    %951 = vmatmul.mubr.f32.gmra.mxu0 %v813
    %v952 = vpop.f32.mrf.mxu0
    %v953 = vadd.f32 0.0, %v952
    %v954 = vpop.f32.mrf.mxu0
    %v955 = vadd.f32 0.0, %v954
    %956 = vdwg.mxu0
    %v957 = vmax.f32 %v882, %v953
    %v958 = vmax.f32 %v884, %v955
    %v959 = vmax.f32 %v810, %v957
    %v960 = vmax.f32 %v811, %v958
    %v961 = vadd.f32 %v959, %v490
    %v962 = vadd.f32 %v960, %v494
    %v963 = vmax.f32 %v961, 0.0
    %v964 = vmax.f32 %v962, 0.0
    %v966 = vsel %vm501, %v964, 0
    %968 = vmatprep.subr.mxu0 0.0
    %969 = vmatpush1.msra.mxu0 %v153
    %970 = vmatprep.subr.mxu0 0.0
    %971 = vmatpush1.msra.mxu0 %v152
    %972 = vmatprep.subr.mxu0 0.0
    %973 = vmatpush1.msra.mxu0 %v151
    %974 = vmatprep.subr.mxu0 0.0
    %975 = vmatpush1.msra.mxu0 %v150
    %976 = vmatprep.subr.mxu0 0.0
    %977 = vmatpush1.msra.mxu0 %v149
    %978 = vmatprep.subr.mxu0 0.0
    %979 = vmatpush1.msra.mxu0 %v148
    %980 = vmatprep.subr.mxu0 0.0
    %981 = vmatpush1.msra.mxu0 %v147
    %982 = vmatprep.subr.mxu0 0.0
    %983 = vmatpush1.msra.mxu0 %v146
    %984 = vmatprep.subr.mxu0 0.0
    %985 = vmatpush1.msra.mxu0 %v145
    %986 = vmatprep.subr.mxu0 0.0
    %987 = vmatpush1.msra.mxu0 %v144
    %988 = vmatprep.subr.mxu0 0.0
    %989 = vmatpush1.msra.mxu0 %v143
    %990 = vmatprep.subr.mxu0 0.0
    %991 = vmatpush1.msra.mxu0 %v142
    %992 = vmatprep.subr.mxu0 0.0
    %993 = vmatpush1.msra.mxu0 %v141
    %994 = vmatprep.subr.mxu0 0.0
    %995 = vmatpush1.msra.mxu0 %v140
    %996 = vmatprep.subr.mxu0 0.0
    %997 = vmatpush1.msra.mxu0 %v139
    %998 = vmatprep.subr.mxu0 0.0
    %999 = vmatpush1.msra.mxu0 %v138
    %1000 = vmatprep.subr.mxu0 0.0
    %1001 = vmatpush2.msra.mxu0 0.0
    %1002 = vmatprep.subr.mxu0 0.0
    %1003 = vmatpush2.msra.mxu0 0.0
    %1004 = vmatprep.subr.mxu0 0.0
    %1005 = vmatpush2.msra.mxu0 0.0
    %1006 = vmatprep.subr.mxu0 0.0
    %1007 = vmatpush2.msra.mxu0 0.0
    %1008 = vmatprep.subr.mxu0 0.0
    %1009 = vmatpush2.msra.mxu0 0.0
    %1010 = vmatprep.subr.mxu0 0.0
    %1011 = vmatpush2.msra.mxu0 0.0
    %1012 = vmatprep.subr.mxu0 0.0
    %1013 = vmatpush2.msra.mxu0 0.0
    %1014 = vmatprep.subr.mxu0 0.0
    %1015 = vmatpush2.msra.mxu0 0.0
    %1016 = vmatprep.subr.mxu0 0.0
    %1017 = vmatpush2.msra.mxu0 0.0
    %1018 = vmatprep.subr.mxu0 0.0
    %1019 = vmatpush2.msra.mxu0 0.0
    %1020 = vmatprep.subr.mxu0 0.0
    %1021 = vmatpush2.msra.mxu0 %v159
    %1022 = vmatprep.subr.mxu0 0.0
    %1023 = vmatpush2.msra.mxu0 %v158
    %1024 = vmatprep.subr.mxu0 0.0
    %1025 = vmatpush2.msra.mxu0 %v157
    %1026 = vmatprep.subr.mxu0 0.0
    %1027 = vmatpush2.msra.mxu0 %v156
    %1028 = vmatprep.subr.mxu0 0.0
    %1029 = vmatpush2.msra.mxu0 %v155
    %1030 = vmatprep.subr.mxu0 0.0
    %1031 = vmatpush2.msra.mxu0 %v154
    %1032 = vmatprep.mubr.f32.mxu0 %v966
    %1033 = vmatmul.mubr.f32.gmra.mxu0 %v963
    %v1034 = vpop.f32.mrf.mxu0
    %v1035 = vadd.f32 0.0, %v1034
    %v1036 = vpop.f32.mrf.mxu0
    %1037 = vdwg.mxu0
    %1038 = vmatprep.subr.mxu0 0.0
    %1039 = vmatpush1.msra.mxu0 %v176
    %1040 = vmatprep.subr.mxu0 0.0
    %1041 = vmatpush1.msra.mxu0 %v175
    %1042 = vmatprep.subr.mxu0 0.0
    %1043 = vmatpush1.msra.mxu0 %v174
    %1044 = vmatprep.subr.mxu0 0.0
    %1045 = vmatpush1.msra.mxu0 %v173
    %1046 = vmatprep.subr.mxu0 0.0
    %1047 = vmatpush1.msra.mxu0 %v172
    %1048 = vmatprep.subr.mxu0 0.0
    %1049 = vmatpush1.msra.mxu0 %v171
    %1050 = vmatprep.subr.mxu0 0.0
    %1051 = vmatpush1.msra.mxu0 %v170
    %1052 = vmatprep.subr.mxu0 0.0
    %1053 = vmatpush1.msra.mxu0 %v169
    %1054 = vmatprep.subr.mxu0 0.0
    %1055 = vmatpush1.msra.mxu0 %v168
    %1056 = vmatprep.subr.mxu0 0.0
    %1057 = vmatpush1.msra.mxu0 %v167
    %1058 = vmatprep.subr.mxu0 0.0
    %1059 = vmatpush1.msra.mxu0 %v166
    %1060 = vmatprep.subr.mxu0 0.0
    %1061 = vmatpush1.msra.mxu0 %v165
    %1062 = vmatprep.subr.mxu0 0.0
    %1063 = vmatpush1.msra.mxu0 %v164
    %1064 = vmatprep.subr.mxu0 0.0
    %1065 = vmatpush1.msra.mxu0 %v163
    %1066 = vmatprep.subr.mxu0 0.0
    %1067 = vmatpush1.msra.mxu0 %v162
    %1068 = vmatprep.subr.mxu0 0.0
    %1069 = vmatpush1.msra.mxu0 %v161
    %1070 = vmatprep.subr.mxu0 0.0
    %1071 = vmatpush2.msra.mxu0 0.0
    %1072 = vmatprep.subr.mxu0 0.0
    %1073 = vmatpush2.msra.mxu0 0.0
    %1074 = vmatprep.subr.mxu0 0.0
    %1075 = vmatpush2.msra.mxu0 0.0
    %1076 = vmatprep.subr.mxu0 0.0
    %1077 = vmatpush2.msra.mxu0 0.0
    %1078 = vmatprep.subr.mxu0 0.0
    %1079 = vmatpush2.msra.mxu0 0.0
    %1080 = vmatprep.subr.mxu0 0.0
    %1081 = vmatpush2.msra.mxu0 0.0
    %1082 = vmatprep.subr.mxu0 0.0
    %1083 = vmatpush2.msra.mxu0 0.0
    %1084 = vmatprep.subr.mxu0 0.0
    %1085 = vmatpush2.msra.mxu0 0.0
    %1086 = vmatprep.subr.mxu0 0.0
    %1087 = vmatpush2.msra.mxu0 0.0
    %1088 = vmatprep.subr.mxu0 0.0
    %1089 = vmatpush2.msra.mxu0 0.0
    %1090 = vmatprep.subr.mxu0 0.0
    %1091 = vmatpush2.msra.mxu0 %v182
    %1092 = vmatprep.subr.mxu0 0.0
    %1093 = vmatpush2.msra.mxu0 %v181
    %1094 = vmatprep.subr.mxu0 0.0
    %1095 = vmatpush2.msra.mxu0 %v180
    %1096 = vmatprep.subr.mxu0 0.0
    %1097 = vmatpush2.msra.mxu0 %v179
    %1098 = vmatprep.subr.mxu0 0.0
    %1099 = vmatpush2.msra.mxu0 %v178
    %1100 = vmatprep.subr.mxu0 0.0
    %1101 = vmatpush2.msra.mxu0 %v177
    %1102 = vmatprep.mubr.f32.mxu0 %v966
    %1103 = vmatmul.mubr.f32.gmra.mxu0 %v963
    %v1104 = vpop.f32.mrf.mxu0
    %v1105 = vadd.f32 0.0, %v1104
    %v1106 = vpop.f32.mrf.mxu0
    %1107 = vdwg.mxu0
    %v1108 = vmax.f32 %v1035, %v1105
    %v1109 = vadd.f32 %v1108, %v650
    %v1110 = vmax.f32 %v1109, 0.0
    %v1111 = vmax.f32 %v1110, %v658
    %v1112 = vld [vmem:[%s7] sm:$0x1]
    %v1113 = vld [vmem:[#allocation7] sm:$0xff]
    %v1114 = vld [vmem:[#allocation7 + $0x8] sm:$0xff]
    %v1115 = vld [vmem:[#allocation7 + $0x10] sm:$0xff]
    %v1116 = vld [vmem:[#allocation7 + $0x18] sm:$0xff]
    %v1117 = vld [vmem:[#allocation7 + $0x20] sm:$0xff]
    %v1118 = vld [vmem:[#allocation7 + $0x28] sm:$0xff]
    %v1119 = vld [vmem:[#allocation7 + $0x30] sm:$0xff]
    %v1120 = vld [vmem:[#allocation7 + $0x38] sm:$0xff]
    %v1121 = vld [vmem:[#allocation7 + $0x40] sm:$0xff]
    %v1122 = vld [vmem:[#allocation7 + $0x48] sm:$0xff]
    %v1123 = vld [vmem:[#allocation7 + $0x50] sm:$0xff]
    %vm1124 = vcmask 719872
    %v1126 = vsel %vm1124, %v660, 0
    %1128 = vmatprep.subr.mxu0 0.0
    %1129 = vmatpush1.msra.mxu0 0.0
    %1130 = vmatprep.subr.mxu0 0.0
    %1131 = vmatpush1.msra.mxu0 0.0
    %1132 = vmatprep.subr.mxu0 0.0
    %1133 = vmatpush1.msra.mxu0 0.0
    %1134 = vmatprep.subr.mxu0 0.0
    %1135 = vmatpush1.msra.mxu0 0.0
    %1136 = vmatprep.subr.mxu0 0.0
    %1137 = vmatpush1.msra.mxu0 0.0
    %1138 = vmatprep.subr.mxu0 0.0
    %1139 = vmatpush1.msra.mxu0 %v1123
    %1140 = vmatprep.subr.mxu0 0.0
    %1141 = vmatpush1.msra.mxu0 %v1122
    %1142 = vmatprep.subr.mxu0 0.0
    %1143 = vmatpush1.msra.mxu0 %v1121
    %1144 = vmatprep.subr.mxu0 0.0
    %1145 = vmatpush1.msra.mxu0 %v1120
    %1146 = vmatprep.subr.mxu0 0.0
    %1147 = vmatpush1.msra.mxu0 %v1119
    %1148 = vmatprep.subr.mxu0 0.0
    %1149 = vmatpush1.msra.mxu0 %v1118
    %1150 = vmatprep.subr.mxu0 0.0
    %1151 = vmatpush1.msra.mxu0 %v1117
    %1152 = vmatprep.subr.mxu0 0.0
    %1153 = vmatpush1.msra.mxu0 %v1116
    %1154 = vmatprep.subr.mxu0 0.0
    %1155 = vmatpush1.msra.mxu0 %v1115
    %1156 = vmatprep.subr.mxu0 0.0
    %1157 = vmatpush1.msra.mxu0 %v1114
    %1158 = vmatprep.subr.mxu0 0.0
    %1159 = vmatpush1.msra.mxu0 %v1113
    %1160 = vmatprep.subr.mxu0 0.0
    %1161 = vmatpush2.msra.mxu0 0.0
    %1162 = vmatprep.subr.mxu0 0.0
    %1163 = vmatpush2.msra.mxu0 0.0
    %1164 = vmatprep.subr.mxu0 0.0
    %1165 = vmatpush2.msra.mxu0 0.0
    %1166 = vmatprep.subr.mxu0 0.0
    %1167 = vmatpush2.msra.mxu0 0.0
    %1168 = vmatprep.subr.mxu0 0.0
    %1169 = vmatpush2.msra.mxu0 0.0
    %1170 = vmatprep.subr.mxu0 0.0
    %1171 = vmatpush2.msra.mxu0 0.0
    %1172 = vmatprep.subr.mxu0 0.0
    %1173 = vmatpush2.msra.mxu0 0.0
    %1174 = vmatprep.subr.mxu0 0.0
    %1175 = vmatpush2.msra.mxu0 0.0
    %1176 = vmatprep.subr.mxu0 0.0
    %1177 = vmatpush2.msra.mxu0 0.0
    %1178 = vmatprep.subr.mxu0 0.0
    %1179 = vmatpush2.msra.mxu0 0.0
    %1180 = vmatprep.subr.mxu0 0.0
    %1181 = vmatpush2.msra.mxu0 0.0
    %1182 = vmatprep.subr.mxu0 0.0
    %1183 = vmatpush2.msra.mxu0 0.0
    %1184 = vmatprep.subr.mxu0 0.0
    %1185 = vmatpush2.msra.mxu0 0.0
    %1186 = vmatprep.subr.mxu0 0.0
    %1187 = vmatpush2.msra.mxu0 0.0
    %1188 = vmatprep.subr.mxu0 0.0
    %1189 = vmatpush2.msra.mxu0 0.0
    %1190 = vmatprep.subr.mxu0 0.0
    %1191 = vmatpush2.msra.mxu0 0.0
    %1192 = vmatprep.mubr.f32.mxu0 0.0
    %1193 = vmatmul.mubr.f32.gmra.mxu0 %v1126
    %v1194 = vpop.f32.mrf.mxu0
    %v1195 = vadd.f32 0.0, %v1194
    %v1196 = vpop.f32.mrf.mxu0
    %1197 = vdwg.mxu0
    %v1199 = vlaneseq
    %v1200 = vshrl.u32 %v1199, 7
    %v1201 = vsub.s32 0, %v1200
    %v1202 = vrot.slane %v1112, %v1201
    %v1204 = vadd.f32 %v1202, %v1195
    %s1205 = scalar_lea.vmem [#allocation7], 88
    %v1206 = vld [vmem:[%s1205] sm:$0xff]
    %v1207 = vld [vmem:[%s1205 + $0x8] sm:$0xff]
    %v1208 = vld [vmem:[%s1205 + $0x10] sm:$0xff]
    %v1209 = vld [vmem:[%s1205 + $0x18] sm:$0xff]
    %v1210 = vld [vmem:[%s1205 + $0x20] sm:$0xff]
    %v1211 = vld [vmem:[%s1205 + $0x28] sm:$0xff]
    %v1212 = vld [vmem:[%s1205 + $0x30] sm:$0xff]
    %v1213 = vld [vmem:[%s1205 + $0x38] sm:$0xff]
    %v1214 = vld [vmem:[%s1205 + $0x40] sm:$0xff]
    %v1215 = vld [vmem:[%s1205 + $0x48] sm:$0xff]
    %v1216 = vld [vmem:[%s1205 + $0x50] sm:$0xff]
    %v1218 = vsel %vm1124, %v1111, 0
    %1220 = vmatprep.subr.mxu0 0.0
    %1221 = vmatpush1.msra.mxu0 0.0
    %1222 = vmatprep.subr.mxu0 0.0
    %1223 = vmatpush1.msra.mxu0 0.0
    %1224 = vmatprep.subr.mxu0 0.0
    %1225 = vmatpush1.msra.mxu0 0.0
    %1226 = vmatprep.subr.mxu0 0.0
    %1227 = vmatpush1.msra.mxu0 0.0
    %1228 = vmatprep.subr.mxu0 0.0
    %1229 = vmatpush1.msra.mxu0 0.0
    %1230 = vmatprep.subr.mxu0 0.0
    %1231 = vmatpush1.msra.mxu0 %v1216
    %1232 = vmatprep.subr.mxu0 0.0
    %1233 = vmatpush1.msra.mxu0 %v1215
    %1234 = vmatprep.subr.mxu0 0.0
    %1235 = vmatpush1.msra.mxu0 %v1214
    %1236 = vmatprep.subr.mxu0 0.0
    %1237 = vmatpush1.msra.mxu0 %v1213
    %1238 = vmatprep.subr.mxu0 0.0
    %1239 = vmatpush1.msra.mxu0 %v1212
    %1240 = vmatprep.subr.mxu0 0.0
    %1241 = vmatpush1.msra.mxu0 %v1211
    %1242 = vmatprep.subr.mxu0 0.0
    %1243 = vmatpush1.msra.mxu0 %v1210
    %1244 = vmatprep.subr.mxu0 0.0
    %1245 = vmatpush1.msra.mxu0 %v1209
    %1246 = vmatprep.subr.mxu0 0.0
    %1247 = vmatpush1.msra.mxu0 %v1208
    %1248 = vmatprep.subr.mxu0 0.0
    %1249 = vmatpush1.msra.mxu0 %v1207
    %1250 = vmatprep.subr.mxu0 0.0
    %1251 = vmatpush1.msra.mxu0 %v1206
    %1252 = vmatprep.subr.mxu0 0.0
    %1253 = vmatpush2.msra.mxu0 0.0
    %1254 = vmatprep.subr.mxu0 0.0
    %1255 = vmatpush2.msra.mxu0 0.0
    %1256 = vmatprep.subr.mxu0 0.0
    %1257 = vmatpush2.msra.mxu0 0.0
    %1258 = vmatprep.subr.mxu0 0.0
    %1259 = vmatpush2.msra.mxu0 0.0
    %1260 = vmatprep.subr.mxu0 0.0
    %1261 = vmatpush2.msra.mxu0 0.0
    %1262 = vmatprep.subr.mxu0 0.0
    %1263 = vmatpush2.msra.mxu0 0.0
    %1264 = vmatprep.subr.mxu0 0.0
    %1265 = vmatpush2.msra.mxu0 0.0
    %1266 = vmatprep.subr.mxu0 0.0
    %1267 = vmatpush2.msra.mxu0 0.0
    %1268 = vmatprep.subr.mxu0 0.0
    %1269 = vmatpush2.msra.mxu0 0.0
    %1270 = vmatprep.subr.mxu0 0.0
    %1271 = vmatpush2.msra.mxu0 0.0
    %1272 = vmatprep.subr.mxu0 0.0
    %1273 = vmatpush2.msra.mxu0 0.0
    %1274 = vmatprep.subr.mxu0 0.0
    %1275 = vmatpush2.msra.mxu0 0.0
    %1276 = vmatprep.subr.mxu0 0.0
    %1277 = vmatpush2.msra.mxu0 0.0
    %1278 = vmatprep.subr.mxu0 0.0
    %1279 = vmatpush2.msra.mxu0 0.0
    %1280 = vmatprep.subr.mxu0 0.0
    %1281 = vmatpush2.msra.mxu0 0.0
    %1282 = vmatprep.subr.mxu0 0.0
    %1283 = vmatpush2.msra.mxu0 0.0
    %1284 = vmatprep.mubr.f32.mxu0 0.0
    %1285 = vmatmul.mubr.f32.gmra.mxu0 %v1218
    %v1286 = vpop.f32.mrf.mxu0
    %v1287 = vadd.f32 0.0, %v1286
    %v1288 = vpop.f32.mrf.mxu0
    %1289 = vdwg.mxu0
    %v1290 = vadd.f32 %v1204, %v1287
    %v1291 = vmax.f32 %v1290, 0.0
    %v1292 = vld [vmem:[%s8] sm:$0xff]
    %v1293 = vld [vmem:[%s8 + $0x8] sm:$0xff]
    %v1294 = vld [vmem:[%s8 + $0x10] sm:$0xff]
    %v1295 = vld [vmem:[%s8 + $0x18] sm:$0xff]
    %v1296 = vld [vmem:[%s8 + $0x20] sm:$0xff]
    %v1297 = vld [vmem:[%s8 + $0x28] sm:$0xff]
    %v1298 = vld [vmem:[%s8 + $0x30] sm:$0xff]
    %v1299 = vld [vmem:[%s8 + $0x38] sm:$0xff]
    %v1300 = vld [vmem:[%s9] sm:$0x1]
    %v1302 = vlaneseq
    %v1303 = vshrl.u32 %v1302, 7
    %v1304 = vsub.s32 0, %v1303
    %v1305 = vrot.slane %v1300, %v1304
    %vm1307 = vcmask 523264
    %v1309 = vsel %vm1307, %v1291, 0
    %1311 = vmatprep.subr.mxu0 0.0
    %1312 = vmatpush1.msra.mxu0 0.0
    %1313 = vmatprep.subr.mxu0 0.0
    %1314 = vmatpush1.msra.mxu0 0.0
    %1315 = vmatprep.subr.mxu0 0.0
    %1316 = vmatpush1.msra.mxu0 0.0
    %1317 = vmatprep.subr.mxu0 0.0
    %1318 = vmatpush1.msra.mxu0 0.0
    %1319 = vmatprep.subr.mxu0 0.0
    %1320 = vmatpush1.msra.mxu0 0.0
    %1321 = vmatprep.subr.mxu0 0.0
    %1322 = vmatpush1.msra.mxu0 0.0
    %1323 = vmatprep.subr.mxu0 0.0
    %1324 = vmatpush1.msra.mxu0 0.0
    %1325 = vmatprep.subr.mxu0 0.0
    %1326 = vmatpush1.msra.mxu0 0.0
    %1327 = vmatprep.subr.mxu0 0.0
    %1328 = vmatpush1.msra.mxu0 %v1299
    %1329 = vmatprep.subr.mxu0 0.0
    %1330 = vmatpush1.msra.mxu0 %v1298
    %1331 = vmatprep.subr.mxu0 0.0
    %1332 = vmatpush1.msra.mxu0 %v1297
    %1333 = vmatprep.subr.mxu0 0.0
    %1334 = vmatpush1.msra.mxu0 %v1296
    %1335 = vmatprep.subr.mxu0 0.0
    %1336 = vmatpush1.msra.mxu0 %v1295
    %1337 = vmatprep.subr.mxu0 0.0
    %1338 = vmatpush1.msra.mxu0 %v1294
    %1339 = vmatprep.subr.mxu0 0.0
    %1340 = vmatpush1.msra.mxu0 %v1293
    %1341 = vmatprep.subr.mxu0 0.0
    %1342 = vmatpush1.msra.mxu0 %v1292
    %1343 = vmatprep.subr.mxu0 0.0
    %1344 = vmatpush2.msra.mxu0 0.0
    %1345 = vmatprep.subr.mxu0 0.0
    %1346 = vmatpush2.msra.mxu0 0.0
    %1347 = vmatprep.subr.mxu0 0.0
    %1348 = vmatpush2.msra.mxu0 0.0
    %1349 = vmatprep.subr.mxu0 0.0
    %1350 = vmatpush2.msra.mxu0 0.0
    %1351 = vmatprep.subr.mxu0 0.0
    %1352 = vmatpush2.msra.mxu0 0.0
    %1353 = vmatprep.subr.mxu0 0.0
    %1354 = vmatpush2.msra.mxu0 0.0
    %1355 = vmatprep.subr.mxu0 0.0
    %1356 = vmatpush2.msra.mxu0 0.0
    %1357 = vmatprep.subr.mxu0 0.0
    %1358 = vmatpush2.msra.mxu0 0.0
    %1359 = vmatprep.subr.mxu0 0.0
    %1360 = vmatpush2.msra.mxu0 0.0
    %1361 = vmatprep.subr.mxu0 0.0
    %1362 = vmatpush2.msra.mxu0 0.0
    %1363 = vmatprep.subr.mxu0 0.0
    %1364 = vmatpush2.msra.mxu0 0.0
    %1365 = vmatprep.subr.mxu0 0.0
    %1366 = vmatpush2.msra.mxu0 0.0
    %1367 = vmatprep.subr.mxu0 0.0
    %1368 = vmatpush2.msra.mxu0 0.0
    %1369 = vmatprep.subr.mxu0 0.0
    %1370 = vmatpush2.msra.mxu0 0.0
    %1371 = vmatprep.subr.mxu0 0.0
    %1372 = vmatpush2.msra.mxu0 0.0
    %1373 = vmatprep.subr.mxu0 0.0
    %1374 = vmatpush2.msra.mxu0 0.0
    %1375 = vmatprep.mubr.f32.mxu0 0.0
    %1376 = vmatmul.mubr.f32.gmra.mxu0 %v1309
    %v1377 = vpop.f32.mrf.mxu0
    %v1378 = vadd.f32 %v1305, %v1377
    %v1379 = vpop.f32.mrf.mxu0
    %1380 = vdwg.mxu0
    %v1381 = vmax.f32 %v1378, 0.0
    %v1382 = vld [vmem:[#allocation8] sm:$0xff]
    %v1383 = vld [vmem:[#allocation8 + $0x8] sm:$0xff]
    %v1384 = vld [vmem:[%s11] sm:$0x1]
    %v1386 = vlaneseq
    %v1387 = vshrl.u32 %v1386, 7
    %v1388 = vsub.s32 0, %v1387
    %v1389 = vrot.slane %v1384, %v1388
    %vm1391 = vcmask 130048
    %v1393 = vsel %vm1391, %v1381, 0
    %1395 = vmatprep.subr.mxu0 0.0
    %1396 = vmatpush1.msra.mxu0 0.0
    %1397 = vmatprep.subr.mxu0 0.0
    %1398 = vmatpush1.msra.mxu0 0.0
    %1399 = vmatprep.subr.mxu0 0.0
    %1400 = vmatpush1.msra.mxu0 0.0
    %1401 = vmatprep.subr.mxu0 0.0
    %1402 = vmatpush1.msra.mxu0 0.0
    %1403 = vmatprep.subr.mxu0 0.0
    %1404 = vmatpush1.msra.mxu0 0.0
    %1405 = vmatprep.subr.mxu0 0.0
    %1406 = vmatpush1.msra.mxu0 0.0
    %1407 = vmatprep.subr.mxu0 0.0
    %1408 = vmatpush1.msra.mxu0 0.0
    %1409 = vmatprep.subr.mxu0 0.0
    %1410 = vmatpush1.msra.mxu0 0.0
    %1411 = vmatprep.subr.mxu0 0.0
    %1412 = vmatpush1.msra.mxu0 0.0
    %1413 = vmatprep.subr.mxu0 0.0
    %1414 = vmatpush1.msra.mxu0 0.0
    %1415 = vmatprep.subr.mxu0 0.0
    %1416 = vmatpush1.msra.mxu0 0.0
    %1417 = vmatprep.subr.mxu0 0.0
    %1418 = vmatpush1.msra.mxu0 0.0
    %1419 = vmatprep.subr.mxu0 0.0
    %1420 = vmatpush1.msra.mxu0 0.0
    %1421 = vmatprep.subr.mxu0 0.0
    %1422 = vmatpush1.msra.mxu0 0.0
    %1423 = vmatprep.subr.mxu0 0.0
    %1424 = vmatpush1.msra.mxu0 %v1383
    %1425 = vmatprep.subr.mxu0 0.0
    %1426 = vmatpush1.msra.mxu0 %v1382
    %1427 = vmatprep.subr.mxu0 0.0
    %1428 = vmatpush2.msra.mxu0 0.0
    %1429 = vmatprep.subr.mxu0 0.0
    %1430 = vmatpush2.msra.mxu0 0.0
    %1431 = vmatprep.subr.mxu0 0.0
    %1432 = vmatpush2.msra.mxu0 0.0
    %1433 = vmatprep.subr.mxu0 0.0
    %1434 = vmatpush2.msra.mxu0 0.0
    %1435 = vmatprep.subr.mxu0 0.0
    %1436 = vmatpush2.msra.mxu0 0.0
    %1437 = vmatprep.subr.mxu0 0.0
    %1438 = vmatpush2.msra.mxu0 0.0
    %1439 = vmatprep.subr.mxu0 0.0
    %1440 = vmatpush2.msra.mxu0 0.0
    %1441 = vmatprep.subr.mxu0 0.0
    %1442 = vmatpush2.msra.mxu0 0.0
    %1443 = vmatprep.subr.mxu0 0.0
    %1444 = vmatpush2.msra.mxu0 0.0
    %1445 = vmatprep.subr.mxu0 0.0
    %1446 = vmatpush2.msra.mxu0 0.0
    %1447 = vmatprep.subr.mxu0 0.0
    %1448 = vmatpush2.msra.mxu0 0.0
    %1449 = vmatprep.subr.mxu0 0.0
    %1450 = vmatpush2.msra.mxu0 0.0
    %1451 = vmatprep.subr.mxu0 0.0
    %1452 = vmatpush2.msra.mxu0 0.0
    %1453 = vmatprep.subr.mxu0 0.0
    %1454 = vmatpush2.msra.mxu0 0.0
    %1455 = vmatprep.subr.mxu0 0.0
    %1456 = vmatpush2.msra.mxu0 0.0
    %1457 = vmatprep.subr.mxu0 0.0
    %1458 = vmatpush2.msra.mxu0 0.0
    %1459 = vmatprep.mubr.f32.mxu0 0.0
    %1460 = vmatmul.mubr.f32.gmra.mxu0 %v1393
    %v1461 = vpop.f32.mrf.mxu0
    %v1462 = vadd.f32 %v1389, %v1461
    %v1463 = vpop.f32.mrf.mxu0
    %1464 = vdwg.mxu0
    %1465 = vst [vmem:[#allocation10] sm:$0x3] %v1462
    // Predicated region
    $region66: #{forward.1} parent=1 // pred_check
      _
    $region67: #{forward.1} parent=1 // pred_check_branch
      %1467 = sbr.rel (0) target = $region69
    $region68: #{forward.1} parent=1 // pred_region
      %s1469 = ssub.s32 32, 32
      %1470 = vsyncadd [#allocation4], %s1469
      %s1472 = sshll.u32 [#allocation10], 4
      %s1473 = int_to_ptr.vmem [resolvable:$true] %s1472
      %1475 = dma.vmem_to_hbm [thread:$0]  %s1473, 32, %s12, [#allocation4]
    $region69: #{forward.1} parent=1 // pred_fallthru
      _
    // Predicated region
    $region70: #{forward.1} parent=1 // pred_check
      _
    $region71: #{forward.1} parent=1 // pred_check_branch
      %1477 = sbr.rel (0) target = $region73
    $region72: #{forward.1} parent=1 // pred_region
      %1478 = dma.done [#allocation4], 32
    $region73: #{forward.1} parent=1 // pred_fallthru
      _
    %1479 = vsyncpa [#allocation3], 1
    %1480 = vsyncpa [#allocation6], 1
    %1481 = vsyncpa [#allocation9], 1
    %1482 = vsyncpa [#allocation4], 1

</llo_original>
